<compile_context>
chip_gen: v5e
topology: v5e:2x2
jax: 0.10.0
libtpu: 0.0.40
codegen_flags: <defaults>
</compile_context>

<pallas_src>
import jax
import jax.numpy as jnp
from jax.experimental import pallas as pl
from jax.experimental.pallas import tpu as pltpu

N_FEAT = 304   # channels of EfficientNet-B5 'features.6.8' (multiple of 8 -> sublane-clean)
PATCH = 16     # synthetic backbone downsample factor (kernel = stride = 16)


# ----------------------------- Pallas kernel ------------------------------- #
def _feat_matmul_kernel(w_ref, p_ref, b_ref, o_ref):
    """One tile: [304, K](bf16) @ [K, TP](bf16) -> f32, + bias, SiLU, bf16 store."""
    acc = jnp.dot(w_ref[...], p_ref[...], preferred_element_type=jnp.float32)
    acc = acc + b_ref[...]                        # f32 bias, broadcast over lanes
    # SiLU: x * sigmoid(x).  Approx EUP reciprocal is well within bf16 output
    # precision and keeps the epilogue off the VALU critical path.
    sig = pl.reciprocal(1.0 + jnp.exp(-acc), approx=True)
    o_ref[...] = (acc * sig).astype(o_ref.dtype)  # bf16 store (halves store bytes)


def _feat_matmul(w_t, bias, patches_t, *, tp):
    """w_t: [304, K] bf16, bias: [304, 1] f32, patches_t: [K, P] bf16 (P % tp == 0).

    Returns [304, P] bf16 = SiLU(w_t @ patches_t + bias).
    """
    cout, k = w_t.shape
    p = patches_t.shape[1]
    return pl.pallas_call(
        _feat_matmul_kernel,
        out_shape=jax.ShapeDtypeStruct((cout, p), jnp.bfloat16),
        grid=(p // tp,),
        in_specs=[
            pl.BlockSpec((cout, k), lambda i: (0, 0)),   # weight: resident, fetched once
            pl.BlockSpec((k, tp), lambda i: (0, i)),     # patch tile (lane-dense)
            pl.BlockSpec((cout, 1), lambda i: (0, 0)),   # bias: resident
        ],
        out_specs=pl.BlockSpec((cout, tp), lambda i: (0, i)),
        compiler_params=pltpu.CompilerParams(
            dimension_semantics=("parallel",),           # megacore sharding on v7x
        ),
        cost_estimate=pl.CostEstimate(
            flops=2 * cout * k * p,
            transcendentals=cout * p,
            bytes_accessed=(w_t.size * 2          # bf16 weight, DMA'd once
                            + bias.size * 4       # f32 bias
                            + patches_t.size * 2  # bf16 patches
                            + cout * p * 2),      # bf16 output
        ),
    )(w_t, patches_t, bias)


# ------------------------------- glue (JAX) -------------------------------- #
def _row_tiling(p):
    """Pick the lane-dim tile TP and the padded patch count.

    Big tiles amortise the ~0.35us per-grid-step overhead (measured: tile
    128 -> 512 moves a mem-bound kernel from ~29% to ~85% of HBM roofline),
    but TP is capped so that whenever there is more than one 128-lane tile of
    work the grid has >= 2 steps, which dimension_semantics=("parallel",)
    shards across v7x's two TensorCores.
    """
    if p >= 1024:
        tp = 512
    elif p >= 512:
        tp = 256
    else:
        tp = 128
    steps = (p + tp - 1) // tp
    return tp, steps * tp


def _nearest_resize(x, out_hw):
    """F.interpolate(..., mode='nearest') semantics: idx = floor(i * in / out).

    When `in` is an exact multiple of `out` (the /2**s multi-scale case) this
    reduces to a plain strided slice — identical indices, no gather passes.
    """
    _, _, h, w = x.shape
    oh, ow = out_hw
    if h % oh == 0 and w % ow == 0:
        return x[:, :, :: h // oh, :: w // ow]
    ridx = (jnp.arange(oh) * h) // oh
    cidx = (jnp.arange(ow) * w) // ow
    return x[:, :, ridx][:, :, :, cidx]


def _im2col_t(x):
    """NCHW -> ([C*PATCH*PATCH, P], (n, ho, wo)); K rows ordered (c, ph, pw).

    Channels-major (patches^T) so the kernel output is [C_out, P] and the NCHW
    restore is a leading-axis-only transpose.  Crops any remainder rows/cols.
    """
    n, c, h, w = x.shape
    ho, wo = h // PATCH, w // PATCH
    x = x[:, :, : ho * PATCH, : wo * PATCH]
    p = x.reshape(n, c, ho, PATCH, wo, PATCH)
    p = p.transpose(1, 3, 5, 0, 2, 4).reshape(c * PATCH * PATCH, n * ho * wo)
    return p, (n, ho, wo)


class CsFlowMultiScaleFeatureExtractor:
    """Multi-scale feature extractor (synthetic EfficientNet-B5 stand-in)."""

    def __init__(self, n_scales, input_size, in_channels=3, seed=42):
        self.n_scales = n_scales
        self.input_size = tuple(input_size)
        # Guard: every scale must still produce at least one 16x16 patch.
        min_hw = min(self.input_size) // (2 ** (n_scales - 1))
        if min_hw < PATCH:
            raise ValueError(
                f"input_size {input_size} too small for n_scales={n_scales}: "
                f"smallest scale is {min_hw} < patch size {PATCH}")
        k = in_channels * PATCH * PATCH
        kw, kb = jax.random.split(jax.random.PRNGKey(seed))
        # Deterministic synthetic weights, channels-major [304, K]; bf16 operands,
        # f32 bias (accumulation/epilogue stay in f32 inside the kernel).
        w = jax.random.normal(kw, (N_FEAT, k), jnp.float32) * (1.0 / k ** 0.5)
        b = jax.random.normal(kb, (N_FEAT, 1), jnp.float32) * 0.01
        self.w_t = w.astype(jnp.bfloat16)   # [304, K]
        self.b = b                          # [304, 1] f32

    def __call__(self, input_tensor):
        # bf16 end-to-end wrapper path: resize, im2col, concat, pad all in bf16.
        x = input_tensor.astype(jnp.bfloat16)

        cols, metas = [], []
        for scale in range(self.n_scales):
            if scale > 0:
                size = (self.input_size[0] // 2 ** scale,
                        self.input_size[1] // 2 ** scale)
                feat_s = _nearest_resize(x, size)
            else:
                feat_s = x
            pt, meta = _im2col_t(feat_s)
            cols.append(pt)
            metas.append(meta)

        patches_t = jnp.concatenate(cols, axis=1)      # [K, P_total] bf16
        p_total = patches_t.shape[1]
        tp, p_pad = _row_tiling(p_total)
        if p_pad != p_total:
            patches_t = jnp.pad(patches_t, ((0, 0), (0, p_pad - p_total)))

        out = _feat_matmul(self.w_t, self.b, patches_t, tp=tp)   # [304, P_pad] bf16

        # Split per scale, drop padded columns, restore NCHW (leading-axis swap only).
        feats = []
        off = 0
        for (n, ho, wo) in metas:
            p_s = n * ho * wo
            f = out[:, off:off + p_s].reshape(N_FEAT, n, ho, wo).transpose(1, 0, 2, 3)
            feats.append(f)
            off += p_s
        return feats


if __name__ == "__main__":
    key = jax.random.PRNGKey(0)
    batch, channels, height, width = 2, 3, 64, 64
    x = jax.random.normal(key, (batch, channels, height, width), jnp.float32)

    extractor = CsFlowMultiScaleFeatureExtractor(n_scales=3, input_size=(height, width))
    feats = extractor(x)
    feats = [jax.block_until_ready(f) for f in feats]

    expected = [
        (batch, N_FEAT, height // (2 ** s) // PATCH, width // (2 ** s) // PATCH)
        for s in range(3)
    ]
    assert [tuple(f.shape) for f in feats] == expected, (
        [tuple(f.shape) for f in feats], expected)
    assert all(bool(jnp.isfinite(f.astype(jnp.float32)).all()) for f in feats)
    print("KERNEL_OK")
</pallas_src>

<mosaic_0001>
module attributes {stable_mosaic.version = 11 : i64} {
  func.func @_feat_matmul_kernel(%arg0: i32, %arg1: memref<304x768xbf16, #tpu.memory_space<vmem>>, %arg2: memref<768x128xbf16, #tpu.memory_space<vmem>>, %arg3: memref<304x1xf32, #tpu.memory_space<vmem>>, %arg4: memref<304x128xbf16, #tpu.memory_space<vmem>>) attributes {dimension_semantics = [#tpu.dimension_semantics<parallel>], iteration_bounds = array<i64: 1>, scalar_prefetch = 0 : i64, scratch_operands = 0 : i64, tpu.core_type = #tpu.core_type<tc>, window_params = [{pipeline_mode = #tpu.pipeline_mode<synchronous>, transform_indices = @transform_0, window_bounds = array<i64: 304, 768>}, {transform_indices = @transform_1, window_bounds = array<i64: 768, 128>}, {pipeline_mode = #tpu.pipeline_mode<synchronous>, transform_indices = @transform_2, window_bounds = array<i64: 304, 1>}, {transform_indices = @transform_3, window_bounds = array<i64: 304, 128>}]} {
    %c0 = arith.constant 0 : index
    %c0_0 = arith.constant 0 : index
    %0 = vector.load %arg1[%c0, %c0_0] : memref<304x768xbf16, #tpu.memory_space<vmem>>, vector<304x768xbf16>
    %c0_1 = arith.constant 0 : index
    %c0_2 = arith.constant 0 : index
    %1 = vector.load %arg2[%c0_1, %c0_2] : memref<768x128xbf16, #tpu.memory_space<vmem>>, vector<768x128xbf16>
    %cst = arith.constant dense<0.000000e+00> : vector<304x128xf32>
    %2 = tpu.matmul %0, %1, %cst {dimension_numbers = #tpu.dot_dimension_numbers<[1], [0], [0], [1], [0, 0, 1, 1], [], []>} : vector<304x768xbf16>, vector<768x128xbf16>, vector<304x128xf32> -> vector<304x128xf32>
    %c0_3 = arith.constant 0 : index
    %c0_4 = arith.constant 0 : index
    %3 = vector.load %arg3[%c0_3, %c0_4] : memref<304x1xf32, #tpu.memory_space<vmem>>, vector<304x1xf32>
    %4 = vector.broadcast %3 : vector<304x1xf32> to vector<304x128xf32>
    %5 = arith.addf %2, %4 : vector<304x128xf32>
    %cst_5 = arith.constant 0.000000e+00 : f32
    %6 = vector.broadcast %cst_5 : f32 to vector<304x128xf32>
    %7 = arith.subf %6, %5 : vector<304x128xf32>
    %8 = math.exp %7 : vector<304x128xf32>
    %cst_6 = arith.constant 1.000000e+00 : f32
    %9 = vector.broadcast %cst_6 : f32 to vector<304x128xf32>
    %10 = arith.addf %9, %8 : vector<304x128xf32>
    %11 = tpu.reciprocal %10 {approx = true} : vector<304x128xf32> -> vector<304x128xf32>
    %12 = arith.mulf %5, %11 : vector<304x128xf32>
    %13 = arith.truncf %12 : vector<304x128xf32> to vector<304x128xbf16>
    %c0_7 = arith.constant 0 : index
    %c0_8 = arith.constant 0 : index
    %14 = vector.load %arg4[%c0_7, %c0_8] : memref<304x128xbf16, #tpu.memory_space<vmem>>, vector<304x128xbf16>
    tpu.vector_store %arg4[%c0_7, %c0_8], %13 {strides = array<i32>} : memref<304x128xbf16, #tpu.memory_space<vmem>>, vector<304x128xbf16>,
    return
  }
  func.func @transform_0(%arg0: i32) -> (i32, i32) {
    %c0_i32 = arith.constant 0 : i32
    %c0_i32_0 = arith.constant 0 : i32
    %c0_i32_1 = arith.constant 0 : i32
    return %c0_i32, %c0_i32_0 : i32, i32
  }
  func.func @transform_1(%arg0: i32) -> (i32, i32) {
    %c0_i32 = arith.constant 0 : i32
    %c0_i32_0 = arith.constant 0 : i32
    return %c0_i32, %arg0 : i32, i32
  }
  func.func @transform_2(%arg0: i32) -> (i32, i32) {
    %c0_i32 = arith.constant 0 : i32
    %c0_i32_0 = arith.constant 0 : i32
    %c0_i32_1 = arith.constant 0 : i32
    return %c0_i32, %c0_i32_0 : i32, i32
  }
  func.func @transform_3(%arg0: i32) -> (i32, i32) {
    %c0_i32 = arith.constant 0 : i32
    %c0_i32_0 = arith.constant 0 : i32
    return %c0_i32, %arg0 : i32, i32
  }
}

</mosaic_0001>

<llo_original>
// kernel: tpu_custom_call.1
$region0: #{tpu_custom_call.1}
  #allocation0 [shape = 'u32[]', space=smem, size = 0x4, offset = 0x4, fixed_abs, tag = 'smem constant byte address 0x4 - core index']
  #allocation1 [shape = 'u32[72,128]{1,0:T(1,128)}', space=vmem, size = 0x9000, scoped, tag = 'internal scratch']
  %s0 = inlined_call_operand.hbm [shape: bf16[304,768], index: 0, kind: input, shape index: {}]
  %s1 = inlined_call_operand.hbm [shape: bf16[768,128], index: 1, kind: input, shape index: {}]
  %s2 = inlined_call_operand.vmem [shape: f32[304,1], index: 2, kind: input, shape index: {}]
  %s3 = inlined_call_operand.hbm [shape: bf16[304,128], index: 3, kind: output, shape index: {}]
  %s4 = sld [smem:[#allocation0]]
  $region30: #{tpu_custom_call.1} parent=0
    _
  %s6 = ssub.s32 1, %s4
  %s7 = scalar_select 0, %s6, %s4
  $region1: #{tpu_custom_call.1} parent=0
    #allocation2 [shape = 'u8[466944]{0}', space=vmem, size = 0x72000, scoped, tag = 'input window, operand 0, single buffered']
    #allocation3 [shape = 's32[1]{0}', space=sflag, size = 0x4, scoped, tag = 'scoped memory for tpu_custom_call.1']
    #allocation4 [shape = 's32[1]{0}', space=sflag, size = 0x4, scoped, tag = 'scoped memory for tpu_custom_call.1']
    #allocation5 [shape = 'u8[196608]{0}', space=vmem, size = 0x30000, scoped, tag = 'input window, operand 1, single buffered']
    #allocation6 [shape = 's32[1]{0}', space=sflag, size = 0x4, scoped, tag = 'scoped memory for tpu_custom_call.1']
    #allocation7 [shape = 'u8[77824]{0}', space=vmem, size = 0x13000, scoped, tag = 'output window, operand 0, single buffered']
    %8 = vsyncpa [#allocation3], 0
    %9 = vsyncpa [#allocation6], 0
    %10 = vsyncpa [#allocation4], 0
    // Predicated region
    $region2: #{tpu_custom_call.1} parent=1 // pred_check
      _
    $region3: #{tpu_custom_call.1} parent=1 // pred_check_branch
      %12 = sbr.rel (0) target = $region5
    $region4: #{tpu_custom_call.1} parent=1 // pred_region
      %14 = vsyncadd [#allocation3], 0
      %s15 = sshll.u32 %s0, 4
      %s16 = int_to_ptr.hbm [resolvable:$true] %s15
      %s17 = sshll.u32 [#allocation2], 4
      %s18 = int_to_ptr.vmem [resolvable:$true] %s17
      %23 = dma.hbm_to_vmem [thread:$0]  %s16, 14592, %s18, [#allocation3], 384, 384, 24
    $region5: #{tpu_custom_call.1} parent=1 // pred_fallthru
      _
    // Predicated region
    $region6: #{tpu_custom_call.1} parent=1 // pred_check
      _
    $region7: #{tpu_custom_call.1} parent=1 // pred_check_branch
      %25 = sbr.rel (0) target = $region9
    $region8: #{tpu_custom_call.1} parent=1 // pred_region
      %27 = vsyncadd [#allocation6], 0
      %s28 = sshll.u32 %s1, 4
      %s29 = int_to_ptr.hbm [resolvable:$true] %s28
      %s30 = sshll.u32 [#allocation5], 4
      %s31 = int_to_ptr.vmem [resolvable:$true] %s30
      %36 = dma.hbm_to_vmem [thread:$0]  %s29, 6144, %s31, [#allocation6], 64, 64, 4
    $region9: #{tpu_custom_call.1} parent=1 // pred_fallthru
      _
    // Predicated region
    $region10: #{tpu_custom_call.1} parent=1 // pred_check
      _
    $region11: #{tpu_custom_call.1} parent=1 // pred_check_branch
      %38 = sbr.rel (0) target = $region13
    $region12: #{tpu_custom_call.1} parent=1 // pred_region
      _
    $region13: #{tpu_custom_call.1} parent=1 // pred_fallthru
      _
    // Predicated region
    $region14: #{tpu_custom_call.1} parent=1 // pred_check
      _
    $region15: #{tpu_custom_call.1} parent=1 // pred_check_branch
      %40 = sbr.rel (0) target = $region17
    $region16: #{tpu_custom_call.1} parent=1 // pred_region
      %42 = dma.done [#allocation3], 14592
    $region17: #{tpu_custom_call.1} parent=1 // pred_fallthru
      _
    // Predicated region
    $region18: #{tpu_custom_call.1} parent=1 // pred_check
      _
    $region19: #{tpu_custom_call.1} parent=1 // pred_check_branch
      %44 = sbr.rel (0) target = $region21
    $region20: #{tpu_custom_call.1} parent=1 // pred_region
      %46 = dma.done [#allocation6], 6144
    $region21: #{tpu_custom_call.1} parent=1 // pred_fallthru
      _
    %v47 = vld [vmem:[#allocation2] sm:$0xff]
    %v48 = vld [vmem:[#allocation2 + $0x8] sm:$0xff]
    %v49 = vld [vmem:[#allocation2 + $0x10] sm:$0xff]
    %v50 = vld [vmem:[#allocation2 + $0x18] sm:$0xff]
    %v51 = vld [vmem:[#allocation2 + $0x20] sm:$0xff]
    %v52 = vld [vmem:[#allocation2 + $0x28] sm:$0xff]
    %v53 = vld [vmem:[#allocation2 + $0x30] sm:$0xff]
    %v54 = vld [vmem:[#allocation2 + $0x38] sm:$0xff]
    %v55 = vld [vmem:[#allocation2 + $0x40] sm:$0xff]
    %v56 = vld [vmem:[#allocation2 + $0x48] sm:$0xff]
    %v57 = vld [vmem:[#allocation2 + $0x50] sm:$0xff]
    %v58 = vld [vmem:[#allocation2 + $0x58] sm:$0xff]
    %v59 = vld [vmem:[#allocation2 + $0x60] sm:$0xff]
    %v60 = vld [vmem:[#allocation2 + $0x68] sm:$0xff]
    %v61 = vld [vmem:[#allocation2 + $0x70] sm:$0xff]
    %v62 = vld [vmem:[#allocation2 + $0x78] sm:$0xff]
    %v63 = vld [vmem:[#allocation2 + $0x80] sm:$0xff]
    %v64 = vld [vmem:[#allocation2 + $0x88] sm:$0xff]
    %v65 = vld [vmem:[#allocation2 + $0x90] sm:$0xff]
    %v66 = vld [vmem:[#allocation2 + $0x98] sm:$0xff]
    %v67 = vld [vmem:[#allocation2 + $0xa0] sm:$0xff]
    %v68 = vld [vmem:[#allocation2 + $0xa8] sm:$0xff]
    %v69 = vld [vmem:[#allocation2 + $0xb0] sm:$0xff]
    %v70 = vld [vmem:[#allocation2 + $0xb8] sm:$0xff]
    %v71 = vld [vmem:[#allocation2 + $0xc0] sm:$0xff]
    %v72 = vld [vmem:[#allocation2 + $0xc8] sm:$0xff]
    %v73 = vld [vmem:[#allocation2 + $0xd0] sm:$0xff]
    %v74 = vld [vmem:[#allocation2 + $0xd8] sm:$0xff]
    %v75 = vld [vmem:[#allocation2 + $0xe0] sm:$0xff]
    %v76 = vld [vmem:[#allocation2 + $0xe8] sm:$0xff]
    %v77 = vld [vmem:[#allocation2 + $0xf0] sm:$0xff]
    %v78 = vld [vmem:[#allocation2 + $0xf8] sm:$0xff]
    %v79 = vld [vmem:[#allocation2 + $0x100] sm:$0xff]
    %v80 = vld [vmem:[#allocation2 + $0x108] sm:$0xff]
    %v81 = vld [vmem:[#allocation2 + $0x110] sm:$0xff]
    %v82 = vld [vmem:[#allocation2 + $0x118] sm:$0xff]
    %v83 = vld [vmem:[#allocation2 + $0x120] sm:$0xff]
    %v84 = vld [vmem:[#allocation2 + $0x128] sm:$0xff]
    %v85 = vld [vmem:[#allocation2 + $0x130] sm:$0xff]
    %v86 = vld [vmem:[#allocation2 + $0x138] sm:$0xff]
    %v87 = vld [vmem:[#allocation2 + $0x140] sm:$0xff]
    %v88 = vld [vmem:[#allocation2 + $0x148] sm:$0xff]
    %v89 = vld [vmem:[#allocation2 + $0x150] sm:$0xff]
    %v90 = vld [vmem:[#allocation2 + $0x158] sm:$0xff]
    %v91 = vld [vmem:[#allocation2 + $0x160] sm:$0xff]
    %v92 = vld [vmem:[#allocation2 + $0x168] sm:$0xff]
    %v93 = vld [vmem:[#allocation2 + $0x170] sm:$0xff]
    %v94 = vld [vmem:[#allocation2 + $0x178] sm:$0xff]
    %v95 = vld [vmem:[#allocation2 + $0x180] sm:$0xff]
    %v96 = vld [vmem:[#allocation2 + $0x188] sm:$0xff]
    %v97 = vld [vmem:[#allocation2 + $0x190] sm:$0xff]
    %v98 = vld [vmem:[#allocation2 + $0x198] sm:$0xff]
    %v99 = vld [vmem:[#allocation2 + $0x1a0] sm:$0xff]
    %v100 = vld [vmem:[#allocation2 + $0x1a8] sm:$0xff]
    %v101 = vld [vmem:[#allocation2 + $0x1b0] sm:$0xff]
    %v102 = vld [vmem:[#allocation2 + $0x1b8] sm:$0xff]
    %v103 = vld [vmem:[#allocation2 + $0x1c0] sm:$0xff]
    %v104 = vld [vmem:[#allocation2 + $0x1c8] sm:$0xff]
    %v105 = vld [vmem:[#allocation2 + $0x1d0] sm:$0xff]
    %v106 = vld [vmem:[#allocation2 + $0x1d8] sm:$0xff]
    %v107 = vld [vmem:[#allocation2 + $0x1e0] sm:$0xff]
    %v108 = vld [vmem:[#allocation2 + $0x1e8] sm:$0xff]
    %v109 = vld [vmem:[#allocation2 + $0x1f0] sm:$0xff]
    %v110 = vld [vmem:[#allocation2 + $0x1f8] sm:$0xff]
    %v111 = vld [vmem:[#allocation2 + $0x200] sm:$0xff]
    %v112 = vld [vmem:[#allocation2 + $0x208] sm:$0xff]
    %v113 = vld [vmem:[#allocation2 + $0x210] sm:$0xff]
    %v114 = vld [vmem:[#allocation2 + $0x218] sm:$0xff]
    %v115 = vld [vmem:[#allocation2 + $0x220] sm:$0xff]
    %v116 = vld [vmem:[#allocation2 + $0x228] sm:$0xff]
    %v117 = vld [vmem:[#allocation2 + $0x230] sm:$0xff]
    %v118 = vld [vmem:[#allocation2 + $0x238] sm:$0xff]
    %v119 = vld [vmem:[#allocation2 + $0x240] sm:$0xff]
    %v120 = vld [vmem:[#allocation2 + $0x248] sm:$0xff]
    %v121 = vld [vmem:[#allocation2 + $0x250] sm:$0xff]
    %v122 = vld [vmem:[#allocation2 + $0x258] sm:$0xff]
    %v123 = vld [vmem:[#allocation2 + $0x260] sm:$0xff]
    %v124 = vld [vmem:[#allocation2 + $0x268] sm:$0xff]
    %v125 = vld [vmem:[#allocation2 + $0x270] sm:$0xff]
    %v126 = vld [vmem:[#allocation2 + $0x278] sm:$0xff]
    %v127 = vld [vmem:[#allocation2 + $0x280] sm:$0xff]
    %v128 = vld [vmem:[#allocation2 + $0x288] sm:$0xff]
    %v129 = vld [vmem:[#allocation2 + $0x290] sm:$0xff]
    %v130 = vld [vmem:[#allocation2 + $0x298] sm:$0xff]
    %v131 = vld [vmem:[#allocation2 + $0x2a0] sm:$0xff]
    %v132 = vld [vmem:[#allocation2 + $0x2a8] sm:$0xff]
    %v133 = vld [vmem:[#allocation2 + $0x2b0] sm:$0xff]
    %v134 = vld [vmem:[#allocation2 + $0x2b8] sm:$0xff]
    %v135 = vld [vmem:[#allocation2 + $0x2c0] sm:$0xff]
    %v136 = vld [vmem:[#allocation2 + $0x2c8] sm:$0xff]
    %v137 = vld [vmem:[#allocation2 + $0x2d0] sm:$0xff]
    %v138 = vld [vmem:[#allocation2 + $0x2d8] sm:$0xff]
    %v139 = vld [vmem:[#allocation2 + $0x2e0] sm:$0xff]
    %v140 = vld [vmem:[#allocation2 + $0x2e8] sm:$0xff]
    %v141 = vld [vmem:[#allocation2 + $0x2f0] sm:$0xff]
    %v142 = vld [vmem:[#allocation2 + $0x2f8] sm:$0xff]
    %v143 = vld [vmem:[#allocation2 + $0x300] sm:$0xff]
    %v144 = vld [vmem:[#allocation2 + $0x308] sm:$0xff]
    %v145 = vld [vmem:[#allocation2 + $0x310] sm:$0xff]
    %v146 = vld [vmem:[#allocation2 + $0x318] sm:$0xff]
    %v147 = vld [vmem:[#allocation2 + $0x320] sm:$0xff]
    %v148 = vld [vmem:[#allocation2 + $0x328] sm:$0xff]
    %v149 = vld [vmem:[#allocation2 + $0x330] sm:$0xff]
    %v150 = vld [vmem:[#allocation2 + $0x338] sm:$0xff]
    %v151 = vld [vmem:[#allocation2 + $0x340] sm:$0xff]
    %v152 = vld [vmem:[#allocation2 + $0x348] sm:$0xff]
    %v153 = vld [vmem:[#allocation2 + $0x350] sm:$0xff]
    %v154 = vld [vmem:[#allocation2 + $0x358] sm:$0xff]
    %v155 = vld [vmem:[#allocation2 + $0x360] sm:$0xff]
    %v156 = vld [vmem:[#allocation2 + $0x368] sm:$0xff]
    %v157 = vld [vmem:[#allocation2 + $0x370] sm:$0xff]
    %v158 = vld [vmem:[#allocation2 + $0x378] sm:$0xff]
    %v159 = vld [vmem:[#allocation2 + $0x380] sm:$0xff]
    %v160 = vld [vmem:[#allocation2 + $0x388] sm:$0xff]
    %v161 = vld [vmem:[#allocation5] sm:$0xf]
    %v162 = vld [vmem:[#allocation5 + $0x4] sm:$0xf]
    %v163 = vld [vmem:[#allocation5 + $0x8] sm:$0xf]
    %v164 = vld [vmem:[#allocation5 + $0xc] sm:$0xf]
    %v165 = vld [vmem:[#allocation5 + $0x10] sm:$0xf]
    %v166 = vld [vmem:[#allocation5 + $0x14] sm:$0xf]
    %v167 = vld [vmem:[#allocation5 + $0x18] sm:$0xf]
    %v168 = vld [vmem:[#allocation5 + $0x1c] sm:$0xf]
    %v169 = vld [vmem:[#allocation5 + $0x20] sm:$0xf]
    %v170 = vld [vmem:[#allocation5 + $0x24] sm:$0xf]
    %v171 = vld [vmem:[#allocation5 + $0x28] sm:$0xf]
    %v172 = vld [vmem:[#allocation5 + $0x2c] sm:$0xf]
    %v173 = vld [vmem:[#allocation5 + $0x30] sm:$0xf]
    %v174 = vld [vmem:[#allocation5 + $0x34] sm:$0xf]
    %v175 = vld [vmem:[#allocation5 + $0x38] sm:$0xf]
    %v176 = vld [vmem:[#allocation5 + $0x3c] sm:$0xf]
    %v177 = vld [vmem:[#allocation5 + $0x40] sm:$0xf]
    %v178 = vld [vmem:[#allocation5 + $0x44] sm:$0xf]
    %v179 = vld [vmem:[#allocation5 + $0x48] sm:$0xf]
    %v180 = vld [vmem:[#allocation5 + $0x4c] sm:$0xf]
    %v181 = vld [vmem:[#allocation5 + $0x50] sm:$0xf]
    %v182 = vld [vmem:[#allocation5 + $0x54] sm:$0xf]
    %v183 = vld [vmem:[#allocation5 + $0x58] sm:$0xf]
    %v184 = vld [vmem:[#allocation5 + $0x5c] sm:$0xf]
    %v185 = vld [vmem:[#allocation5 + $0x60] sm:$0xf]
    %v186 = vld [vmem:[#allocation5 + $0x64] sm:$0xf]
    %v187 = vld [vmem:[#allocation5 + $0x68] sm:$0xf]
    %v188 = vld [vmem:[#allocation5 + $0x6c] sm:$0xf]
    %v189 = vld [vmem:[#allocation5 + $0x70] sm:$0xf]
    %v190 = vld [vmem:[#allocation5 + $0x74] sm:$0xf]
    %v191 = vld [vmem:[#allocation5 + $0x78] sm:$0xf]
    %v192 = vld [vmem:[#allocation5 + $0x7c] sm:$0xf]
    %v193 = vld [vmem:[#allocation5 + $0x80] sm:$0xf]
    %v194 = vld [vmem:[#allocation5 + $0x84] sm:$0xf]
    %v195 = vld [vmem:[#allocation5 + $0x88] sm:$0xf]
    %v196 = vld [vmem:[#allocation5 + $0x8c] sm:$0xf]
    %v197 = vld [vmem:[#allocation5 + $0x90] sm:$0xf]
    %v198 = vld [vmem:[#allocation5 + $0x94] sm:$0xf]
    %v199 = vld [vmem:[#allocation5 + $0x98] sm:$0xf]
    %v200 = vld [vmem:[#allocation5 + $0x9c] sm:$0xf]
    %v201 = vld [vmem:[#allocation5 + $0xa0] sm:$0xf]
    %v202 = vld [vmem:[#allocation5 + $0xa4] sm:$0xf]
    %v203 = vld [vmem:[#allocation5 + $0xa8] sm:$0xf]
    %v204 = vld [vmem:[#allocation5 + $0xac] sm:$0xf]
    %v205 = vld [vmem:[#allocation5 + $0xb0] sm:$0xf]
    %v206 = vld [vmem:[#allocation5 + $0xb4] sm:$0xf]
    %v207 = vld [vmem:[#allocation5 + $0xb8] sm:$0xf]
    %v208 = vld [vmem:[#allocation5 + $0xbc] sm:$0xf]
    %v209 = vld [vmem:[#allocation5 + $0xc0] sm:$0xf]
    %v210 = vld [vmem:[#allocation5 + $0xc4] sm:$0xf]
    %v211 = vld [vmem:[#allocation5 + $0xc8] sm:$0xf]
    %v212 = vld [vmem:[#allocation5 + $0xcc] sm:$0xf]
    %v213 = vld [vmem:[#allocation5 + $0xd0] sm:$0xf]
    %v214 = vld [vmem:[#allocation5 + $0xd4] sm:$0xf]
    %v215 = vld [vmem:[#allocation5 + $0xd8] sm:$0xf]
    %v216 = vld [vmem:[#allocation5 + $0xdc] sm:$0xf]
    %v217 = vld [vmem:[#allocation5 + $0xe0] sm:$0xf]
    %v218 = vld [vmem:[#allocation5 + $0xe4] sm:$0xf]
    %v219 = vld [vmem:[#allocation5 + $0xe8] sm:$0xf]
    %v220 = vld [vmem:[#allocation5 + $0xec] sm:$0xf]
    %v221 = vld [vmem:[#allocation5 + $0xf0] sm:$0xf]
    %v222 = vld [vmem:[#allocation5 + $0xf4] sm:$0xf]
    %v223 = vld [vmem:[#allocation5 + $0xf8] sm:$0xf]
    %v224 = vld [vmem:[#allocation5 + $0xfc] sm:$0xf]
    %v225 = vld [vmem:[#allocation5 + $0x100] sm:$0xf]
    %v226 = vld [vmem:[#allocation5 + $0x104] sm:$0xf]
    %v227 = vld [vmem:[#allocation5 + $0x108] sm:$0xf]
    %v228 = vld [vmem:[#allocation5 + $0x10c] sm:$0xf]
    %v229 = vld [vmem:[#allocation5 + $0x110] sm:$0xf]
    %v230 = vld [vmem:[#allocation5 + $0x114] sm:$0xf]
    %v231 = vld [vmem:[#allocation5 + $0x118] sm:$0xf]
    %v232 = vld [vmem:[#allocation5 + $0x11c] sm:$0xf]
    %v233 = vld [vmem:[#allocation5 + $0x120] sm:$0xf]
    %v234 = vld [vmem:[#allocation5 + $0x124] sm:$0xf]
    %v235 = vld [vmem:[#allocation5 + $0x128] sm:$0xf]
    %v236 = vld [vmem:[#allocation5 + $0x12c] sm:$0xf]
    %v237 = vld [vmem:[#allocation5 + $0x130] sm:$0xf]
    %v238 = vld [vmem:[#allocation5 + $0x134] sm:$0xf]
    %v239 = vld [vmem:[#allocation5 + $0x138] sm:$0xf]
    %v240 = vld [vmem:[#allocation5 + $0x13c] sm:$0xf]
    %v241 = vld [vmem:[#allocation5 + $0x140] sm:$0xf]
    %v242 = vld [vmem:[#allocation5 + $0x144] sm:$0xf]
    %v243 = vld [vmem:[#allocation5 + $0x148] sm:$0xf]
    %v244 = vld [vmem:[#allocation5 + $0x14c] sm:$0xf]
    %v245 = vld [vmem:[#allocation5 + $0x150] sm:$0xf]
    %v246 = vld [vmem:[#allocation5 + $0x154] sm:$0xf]
    %v247 = vld [vmem:[#allocation5 + $0x158] sm:$0xf]
    %v248 = vld [vmem:[#allocation5 + $0x15c] sm:$0xf]
    %v249 = vld [vmem:[#allocation5 + $0x160] sm:$0xf]
    %v250 = vld [vmem:[#allocation5 + $0x164] sm:$0xf]
    %v251 = vld [vmem:[#allocation5 + $0x168] sm:$0xf]
    %v252 = vld [vmem:[#allocation5 + $0x16c] sm:$0xf]
    %v253 = vld [vmem:[#allocation5 + $0x170] sm:$0xf]
    %v254 = vld [vmem:[#allocation5 + $0x174] sm:$0xf]
    %v255 = vld [vmem:[#allocation5 + $0x178] sm:$0xf]
    %v256 = vld [vmem:[#allocation5 + $0x17c] sm:$0xf]
    %v257 = vld [vmem:[%s2] sm:$0xff]
    %v258 = vld [vmem:[%s2 + $0x8] sm:$0xff]
    %v259 = vld [vmem:[%s2 + $0x10] sm:$0xff]
    %v260 = vld [vmem:[%s2 + $0x18] sm:$0xff]
    %v261 = vld [vmem:[%s2 + $0x20] sm:$0xff]
    %v262 = vld [vmem:[%s2 + $0x28] sm:$0xff]
    %v263 = vld [vmem:[%s2 + $0x30] sm:$0xff]
    %v264 = vld [vmem:[%s2 + $0x38] sm:$0xff]
    %v265 = vld [vmem:[%s2 + $0x40] sm:$0xff]
    %v266 = vld [vmem:[%s2 + $0x48] sm:$0xff]
    %v267 = vld [vmem:[%s2 + $0x50] sm:$0xff]
    %v268 = vld [vmem:[%s2 + $0x58] sm:$0xff]
    %v269 = vld [vmem:[%s2 + $0x60] sm:$0xff]
    %v270 = vld [vmem:[%s2 + $0x68] sm:$0xff]
    %v271 = vld [vmem:[%s2 + $0x70] sm:$0xff]
    %v272 = vld [vmem:[%s2 + $0x78] sm:$0xff]
    %v273 = vld [vmem:[%s2 + $0x80] sm:$0xff]
    %v274 = vld [vmem:[%s2 + $0x88] sm:$0xff]
    %v275 = vld [vmem:[%s2 + $0x90] sm:$0xff]
    %v276 = vld [vmem:[%s2 + $0x98] sm:$0xff]
    %v277 = vld [vmem:[%s2 + $0xa0] sm:$0xff]
    %v278 = vld [vmem:[%s2 + $0xa8] sm:$0xff]
    %v279 = vld [vmem:[%s2 + $0xb0] sm:$0xff]
    %v280 = vld [vmem:[%s2 + $0xb8] sm:$0xff]
    %v281 = vld [vmem:[%s2 + $0xc0] sm:$0xff]
    %v282 = vld [vmem:[%s2 + $0xc8] sm:$0xff]
    %v283 = vld [vmem:[%s2 + $0xd0] sm:$0xff]
    %v284 = vld [vmem:[%s2 + $0xd8] sm:$0xff]
    %v285 = vld [vmem:[%s2 + $0xe0] sm:$0xff]
    %v286 = vld [vmem:[%s2 + $0xe8] sm:$0xff]
    %v287 = vld [vmem:[%s2 + $0xf0] sm:$0xff]
    %v288 = vld [vmem:[%s2 + $0xf8] sm:$0xff]
    %v289 = vld [vmem:[%s2 + $0x100] sm:$0xff]
    %v290 = vld [vmem:[%s2 + $0x108] sm:$0xff]
    %v291 = vld [vmem:[%s2 + $0x110] sm:$0xff]
    %v292 = vld [vmem:[%s2 + $0x118] sm:$0xff]
    %v293 = vld [vmem:[%s2 + $0x120] sm:$0xff]
    %v294 = vld [vmem:[%s2 + $0x128] sm:$0xff]
    %296 = vset.pattern.permute.xlu0 0
    %297 = vperm.xlu0 %296, %v257
    %v298 = vpop.permute.xlu0 %297
    %301 = vset.pattern.permute.xlu0 0
    %302 = vperm.xlu0 %301, %v258
    %v303 = vpop.permute.xlu0 %302
    %306 = vset.pattern.permute.xlu0 0
    %307 = vperm.xlu0 %306, %v259
    %v308 = vpop.permute.xlu0 %307
    %311 = vset.pattern.permute.xlu0 0
    %312 = vperm.xlu0 %311, %v260
    %v313 = vpop.permute.xlu0 %312
    %316 = vset.pattern.permute.xlu0 0
    %317 = vperm.xlu0 %316, %v261
    %v318 = vpop.permute.xlu0 %317
    %321 = vset.pattern.permute.xlu0 0
    %322 = vperm.xlu0 %321, %v262
    %v323 = vpop.permute.xlu0 %322
    %326 = vset.pattern.permute.xlu0 0
    %327 = vperm.xlu0 %326, %v263
    %v328 = vpop.permute.xlu0 %327
    %331 = vset.pattern.permute.xlu0 0
    %332 = vperm.xlu0 %331, %v264
    %v333 = vpop.permute.xlu0 %332
    %336 = vset.pattern.permute.xlu0 0
    %337 = vperm.xlu0 %336, %v265
    %v338 = vpop.permute.xlu0 %337
    %341 = vset.pattern.permute.xlu0 0
    %342 = vperm.xlu0 %341, %v266
    %v343 = vpop.permute.xlu0 %342
    %346 = vset.pattern.permute.xlu0 0
    %347 = vperm.xlu0 %346, %v267
    %v348 = vpop.permute.xlu0 %347
    %351 = vset.pattern.permute.xlu0 0
    %352 = vperm.xlu0 %351, %v268
    %v353 = vpop.permute.xlu0 %352
    %356 = vset.pattern.permute.xlu0 0
    %357 = vperm.xlu0 %356, %v269
    %v358 = vpop.permute.xlu0 %357
    %361 = vset.pattern.permute.xlu0 0
    %362 = vperm.xlu0 %361, %v270
    %v363 = vpop.permute.xlu0 %362
    %366 = vset.pattern.permute.xlu0 0
    %367 = vperm.xlu0 %366, %v271
    %v368 = vpop.permute.xlu0 %367
    %371 = vset.pattern.permute.xlu0 0
    %372 = vperm.xlu0 %371, %v272
    %v373 = vpop.permute.xlu0 %372
    %376 = vset.pattern.permute.xlu0 0
    %377 = vperm.xlu0 %376, %v273
    %v378 = vpop.permute.xlu0 %377
    %381 = vset.pattern.permute.xlu0 0
    %382 = vperm.xlu0 %381, %v274
    %v383 = vpop.permute.xlu0 %382
    %386 = vset.pattern.permute.xlu0 0
    %387 = vperm.xlu0 %386, %v275
    %v388 = vpop.permute.xlu0 %387
    %391 = vset.pattern.permute.xlu0 0
    %392 = vperm.xlu0 %391, %v276
    %v393 = vpop.permute.xlu0 %392
    %396 = vset.pattern.permute.xlu0 0
    %397 = vperm.xlu0 %396, %v277
    %v398 = vpop.permute.xlu0 %397
    %401 = vset.pattern.permute.xlu0 0
    %402 = vperm.xlu0 %401, %v278
    %v403 = vpop.permute.xlu0 %402
    %406 = vset.pattern.permute.xlu0 0
    %407 = vperm.xlu0 %406, %v279
    %v408 = vpop.permute.xlu0 %407
    %411 = vset.pattern.permute.xlu0 0
    %412 = vperm.xlu0 %411, %v280
    %v413 = vpop.permute.xlu0 %412
    %416 = vset.pattern.permute.xlu0 0
    %417 = vperm.xlu0 %416, %v281
    %v418 = vpop.permute.xlu0 %417
    %421 = vset.pattern.permute.xlu0 0
    %422 = vperm.xlu0 %421, %v282
    %v423 = vpop.permute.xlu0 %422
    %426 = vset.pattern.permute.xlu0 0
    %427 = vperm.xlu0 %426, %v283
    %v428 = vpop.permute.xlu0 %427
    %431 = vset.pattern.permute.xlu0 0
    %432 = vperm.xlu0 %431, %v284
    %v433 = vpop.permute.xlu0 %432
    %436 = vset.pattern.permute.xlu0 0
    %437 = vperm.xlu0 %436, %v285
    %v438 = vpop.permute.xlu0 %437
    %441 = vset.pattern.permute.xlu0 0
    %442 = vperm.xlu0 %441, %v286
    %v443 = vpop.permute.xlu0 %442
    %446 = vset.pattern.permute.xlu0 0
    %447 = vperm.xlu0 %446, %v287
    %v448 = vpop.permute.xlu0 %447
    %451 = vset.pattern.permute.xlu0 0
    %452 = vperm.xlu0 %451, %v288
    %v453 = vpop.permute.xlu0 %452
    %456 = vset.pattern.permute.xlu0 0
    %457 = vperm.xlu0 %456, %v289
    %v458 = vpop.permute.xlu0 %457
    %461 = vset.pattern.permute.xlu0 0
    %462 = vperm.xlu0 %461, %v290
    %v463 = vpop.permute.xlu0 %462
    %466 = vset.pattern.permute.xlu0 0
    %467 = vperm.xlu0 %466, %v291
    %v468 = vpop.permute.xlu0 %467
    %471 = vset.pattern.permute.xlu0 0
    %472 = vperm.xlu0 %471, %v292
    %v473 = vpop.permute.xlu0 %472
    %476 = vset.pattern.permute.xlu0 0
    %477 = vperm.xlu0 %476, %v293
    %v478 = vpop.permute.xlu0 %477
    %481 = vset.pattern.permute.xlu0 0
    %482 = vperm.xlu0 %481, %v294
    %v483 = vpop.permute.xlu0 %482
    %v599 = vunpack.c.l.b16 %v47
    %v600 = vunpack.c.h.b16 %v47
    %v601 = vunpack.c.l.b16 %v48
    %v602 = vunpack.c.h.b16 %v48
    %v603 = vunpack.c.l.b16 %v49
    %v604 = vunpack.c.h.b16 %v49
    %v605 = vunpack.c.l.b16 %v50
    %v606 = vunpack.c.h.b16 %v50
    %v607 = vunpack.c.l.b16 %v51
    %v608 = vunpack.c.h.b16 %v51
    %v609 = vunpack.c.l.b16 %v52
    %v610 = vunpack.c.h.b16 %v52
    %v611 = vunpack.c.l.b16 %v53
    %v612 = vunpack.c.h.b16 %v53
    %v613 = vunpack.c.l.b16 %v54
    %v614 = vunpack.c.h.b16 %v54
    %v615 = vunpack.c.l.b16 %v55
    %v616 = vunpack.c.h.b16 %v55
    %v617 = vunpack.c.l.b16 %v56
    %v618 = vunpack.c.h.b16 %v56
    %v619 = vunpack.c.l.b16 %v57
    %v620 = vunpack.c.h.b16 %v57
    %v621 = vunpack.c.l.b16 %v58
    %v622 = vunpack.c.h.b16 %v58
    %v623 = vunpack.c.l.b16 %v59
    %v624 = vunpack.c.h.b16 %v59
    %v625 = vunpack.c.l.b16 %v60
    %v626 = vunpack.c.h.b16 %v60
    %v627 = vunpack.c.l.b16 %v61
    %v628 = vunpack.c.h.b16 %v61
    %v629 = vunpack.c.l.b16 %v62
    %v630 = vunpack.c.h.b16 %v62
    %v631 = vunpack.c.l.b16 %v63
    %v632 = vunpack.c.h.b16 %v63
    %v633 = vunpack.c.l.b16 %v64
    %v634 = vunpack.c.h.b16 %v64
    %v635 = vunpack.c.l.b16 %v65
    %v636 = vunpack.c.h.b16 %v65
    %v637 = vunpack.c.l.b16 %v66
    %v638 = vunpack.c.h.b16 %v66
    %v639 = vunpack.c.l.b16 %v67
    %v640 = vunpack.c.h.b16 %v67
    %v641 = vunpack.c.l.b16 %v68
    %v642 = vunpack.c.h.b16 %v68
    %v643 = vunpack.c.l.b16 %v69
    %v644 = vunpack.c.h.b16 %v69
    %v645 = vunpack.c.l.b16 %v70
    %v646 = vunpack.c.h.b16 %v70
    %v647 = vunpack.c.l.b16 %v71
    %v648 = vunpack.c.h.b16 %v71
    %v649 = vunpack.c.l.b16 %v72
    %v650 = vunpack.c.h.b16 %v72
    %v651 = vunpack.c.l.b16 %v73
    %v652 = vunpack.c.h.b16 %v73
    %v653 = vunpack.c.l.b16 %v74
    %v654 = vunpack.c.h.b16 %v74
    %v655 = vunpack.c.l.b16 %v75
    %v656 = vunpack.c.h.b16 %v75
    %v657 = vunpack.c.l.b16 %v76
    %v658 = vunpack.c.h.b16 %v76
    %v659 = vunpack.c.l.b16 %v77
    %v660 = vunpack.c.h.b16 %v77
    %v661 = vunpack.c.l.b16 %v78
    %v662 = vunpack.c.h.b16 %v78
    %v663 = vunpack.c.l.b16 %v79
    %v664 = vunpack.c.h.b16 %v79
    %v665 = vunpack.c.l.b16 %v80
    %v666 = vunpack.c.h.b16 %v80
    %v667 = vunpack.c.l.b16 %v81
    %v668 = vunpack.c.h.b16 %v81
    %v669 = vunpack.c.l.b16 %v82
    %v670 = vunpack.c.h.b16 %v82
    %v671 = vunpack.c.l.b16 %v83
    %v672 = vunpack.c.h.b16 %v83
    %v673 = vunpack.c.l.b16 %v84
    %v674 = vunpack.c.h.b16 %v84
    %v675 = vunpack.c.l.b16 %v85
    %v676 = vunpack.c.h.b16 %v85
    %v677 = vunpack.c.l.b16 %v86
    %v678 = vunpack.c.h.b16 %v86
    %v679 = vunpack.c.l.b16 %v87
    %v680 = vunpack.c.h.b16 %v87
    %v681 = vunpack.c.l.b16 %v88
    %v682 = vunpack.c.h.b16 %v88
    %v683 = vunpack.c.l.b16 %v89
    %v684 = vunpack.c.h.b16 %v89
    %v685 = vunpack.c.l.b16 %v90
    %v686 = vunpack.c.h.b16 %v90
    %v687 = vunpack.c.l.b16 %v91
    %v688 = vunpack.c.h.b16 %v91
    %v689 = vunpack.c.l.b16 %v92
    %v690 = vunpack.c.h.b16 %v92
    %v691 = vunpack.c.l.b16 %v93
    %v692 = vunpack.c.h.b16 %v93
    %v693 = vunpack.c.l.b16 %v94
    %v694 = vunpack.c.h.b16 %v94
    %v695 = vunpack.c.l.b16 %v95
    %v696 = vunpack.c.h.b16 %v95
    %v697 = vunpack.c.l.b16 %v96
    %v698 = vunpack.c.h.b16 %v96
    %v699 = vunpack.c.l.b16 %v97
    %v700 = vunpack.c.h.b16 %v97
    %v701 = vunpack.c.l.b16 %v98
    %v702 = vunpack.c.h.b16 %v98
    %v703 = vunpack.c.l.b16 %v99
    %v704 = vunpack.c.h.b16 %v99
    %v705 = vunpack.c.l.b16 %v100
    %v706 = vunpack.c.h.b16 %v100
    %v707 = vunpack.c.l.b16 %v101
    %v708 = vunpack.c.h.b16 %v101
    %v709 = vunpack.c.l.b16 %v102
    %v710 = vunpack.c.h.b16 %v102
    %v711 = vunpack.c.l.b16 %v103
    %v712 = vunpack.c.h.b16 %v103
    %v713 = vunpack.c.l.b16 %v104
    %v714 = vunpack.c.h.b16 %v104
    %v715 = vunpack.c.l.b16 %v105
    %v716 = vunpack.c.h.b16 %v105
    %v717 = vunpack.c.l.b16 %v106
    %v718 = vunpack.c.h.b16 %v106
    %v719 = vunpack.c.l.b16 %v107
    %v720 = vunpack.c.h.b16 %v107
    %v721 = vunpack.c.l.b16 %v108
    %v722 = vunpack.c.h.b16 %v108
    %v723 = vunpack.c.l.b16 %v109
    %v724 = vunpack.c.h.b16 %v109
    %v725 = vunpack.c.l.b16 %v110
    %v726 = vunpack.c.h.b16 %v110
    %v727 = vunpack.c.l.b16 %v111
    %v728 = vunpack.c.h.b16 %v111
    %v729 = vunpack.c.l.b16 %v112
    %v730 = vunpack.c.h.b16 %v112
    %v731 = vunpack.c.l.b16 %v113
    %v732 = vunpack.c.h.b16 %v113
    %v733 = vunpack.c.l.b16 %v114
    %v734 = vunpack.c.h.b16 %v114
    %v735 = vunpack.c.l.b16 %v115
    %v736 = vunpack.c.h.b16 %v115
    %v737 = vunpack.c.l.b16 %v116
    %v738 = vunpack.c.h.b16 %v116
    %v739 = vunpack.c.l.b16 %v117
    %v740 = vunpack.c.h.b16 %v117
    %v741 = vunpack.c.l.b16 %v118
    %v742 = vunpack.c.h.b16 %v118
    %v743 = vunpack.c.l.b16 %v119
    %v744 = vunpack.c.h.b16 %v119
    %v745 = vunpack.c.l.b16 %v120
    %v746 = vunpack.c.h.b16 %v120
    %v747 = vunpack.c.l.b16 %v121
    %v748 = vunpack.c.h.b16 %v121
    %v749 = vunpack.c.l.b16 %v122
    %v750 = vunpack.c.h.b16 %v122
    %v751 = vunpack.c.l.b16 %v123
    %v752 = vunpack.c.h.b16 %v123
    %v753 = vunpack.c.l.b16 %v124
    %v754 = vunpack.c.h.b16 %v124
    %v755 = vunpack.c.l.b16 %v125
    %v756 = vunpack.c.h.b16 %v125
    %v757 = vunpack.c.l.b16 %v126
    %v758 = vunpack.c.h.b16 %v126
    %v759 = vunpack.c.l.b16 %v127
    %v760 = vunpack.c.h.b16 %v127
    %v761 = vunpack.c.l.b16 %v128
    %v762 = vunpack.c.h.b16 %v128
    %v763 = vunpack.c.l.b16 %v129
    %v764 = vunpack.c.h.b16 %v129
    %v765 = vunpack.c.l.b16 %v130
    %v766 = vunpack.c.h.b16 %v130
    %v767 = vunpack.c.l.b16 %v131
    %v768 = vunpack.c.h.b16 %v131
    %v769 = vunpack.c.l.b16 %v132
    %v770 = vunpack.c.h.b16 %v132
    %v771 = vunpack.c.l.b16 %v133
    %v772 = vunpack.c.h.b16 %v133
    %v773 = vunpack.c.l.b16 %v134
    %v774 = vunpack.c.h.b16 %v134
    %v775 = vunpack.c.l.b16 %v135
    %v776 = vunpack.c.h.b16 %v135
    %v777 = vunpack.c.l.b16 %v136
    %v778 = vunpack.c.h.b16 %v136
    %v779 = vunpack.c.l.b16 %v137
    %v780 = vunpack.c.h.b16 %v137
    %v781 = vunpack.c.l.b16 %v138
    %v782 = vunpack.c.h.b16 %v138
    %v783 = vunpack.c.l.b16 %v139
    %v784 = vunpack.c.h.b16 %v139
    %v785 = vunpack.c.l.b16 %v140
    %v786 = vunpack.c.h.b16 %v140
    %v787 = vunpack.c.l.b16 %v141
    %v788 = vunpack.c.h.b16 %v141
    %v789 = vunpack.c.l.b16 %v142
    %v790 = vunpack.c.h.b16 %v142
    %v791 = vunpack.c.l.b16 %v143
    %v792 = vunpack.c.h.b16 %v143
    %v793 = vunpack.c.l.b16 %v144
    %v794 = vunpack.c.h.b16 %v144
    %v795 = vunpack.c.l.b16 %v145
    %v796 = vunpack.c.h.b16 %v145
    %v797 = vunpack.c.l.b16 %v146
    %v798 = vunpack.c.h.b16 %v146
    %v799 = vunpack.c.l.b16 %v147
    %v800 = vunpack.c.h.b16 %v147
    %v801 = vunpack.c.l.b16 %v148
    %v802 = vunpack.c.h.b16 %v148
    %v803 = vunpack.c.l.b16 %v149
    %v804 = vunpack.c.h.b16 %v149
    %v805 = vunpack.c.l.b16 %v150
    %v806 = vunpack.c.h.b16 %v150
    %v807 = vunpack.c.l.b16 %v151
    %v808 = vunpack.c.h.b16 %v151
    %v809 = vunpack.c.l.b16 %v152
    %v810 = vunpack.c.h.b16 %v152
    %v811 = vunpack.c.l.b16 %v153
    %v812 = vunpack.c.h.b16 %v153
    %v813 = vunpack.c.l.b16 %v154
    %v814 = vunpack.c.h.b16 %v154
    %v815 = vunpack.c.l.b16 %v155
    %v816 = vunpack.c.h.b16 %v155
    %v817 = vunpack.c.l.b16 %v156
    %v818 = vunpack.c.h.b16 %v156
    %v819 = vunpack.c.l.b16 %v157
    %v820 = vunpack.c.h.b16 %v157
    %v821 = vunpack.c.l.b16 %v158
    %v822 = vunpack.c.h.b16 %v158
    %v823 = vunpack.c.l.b16 %v159
    %v824 = vunpack.c.h.b16 %v159
    %v825 = vunpack.c.l.b16 %v160
    %v826 = vunpack.c.h.b16 %v160
    %v827 = vpack.c.b16 %v605, %v599
    %v828 = vpack.c.b16 %v606, %v600
    %v829 = vpack.c.b16 %v607, %v601
    %v830 = vpack.c.b16 %v608, %v602
    %v831 = vpack.c.b16 %v609, %v603
    %v832 = vpack.c.b16 %v610, %v604
    %v833 = vpack.c.b16 %v617, %v611
    %v834 = vpack.c.b16 %v618, %v612
    %v835 = vpack.c.b16 %v619, %v613
    %v836 = vpack.c.b16 %v620, %v614
    %v837 = vpack.c.b16 %v621, %v615
    %v838 = vpack.c.b16 %v622, %v616
    %v839 = vpack.c.b16 %v629, %v623
    %v840 = vpack.c.b16 %v630, %v624
    %v841 = vpack.c.b16 %v631, %v625
    %v842 = vpack.c.b16 %v632, %v626
    %v843 = vpack.c.b16 %v633, %v627
    %v844 = vpack.c.b16 %v634, %v628
    %v845 = vpack.c.b16 %v641, %v635
    %v846 = vpack.c.b16 %v642, %v636
    %v847 = vpack.c.b16 %v643, %v637
    %v848 = vpack.c.b16 %v644, %v638
    %v849 = vpack.c.b16 %v645, %v639
    %v850 = vpack.c.b16 %v646, %v640
    %v851 = vpack.c.b16 %v653, %v647
    %v852 = vpack.c.b16 %v654, %v648
    %v853 = vpack.c.b16 %v655, %v649
    %v854 = vpack.c.b16 %v656, %v650
    %v855 = vpack.c.b16 %v657, %v651
    %v856 = vpack.c.b16 %v658, %v652
    %v857 = vpack.c.b16 %v665, %v659
    %v858 = vpack.c.b16 %v666, %v660
    %v859 = vpack.c.b16 %v667, %v661
    %v860 = vpack.c.b16 %v668, %v662
    %v861 = vpack.c.b16 %v669, %v663
    %v862 = vpack.c.b16 %v670, %v664
    %v863 = vpack.c.b16 %v677, %v671
    %v864 = vpack.c.b16 %v678, %v672
    %v865 = vpack.c.b16 %v679, %v673
    %v866 = vpack.c.b16 %v680, %v674
    %v867 = vpack.c.b16 %v681, %v675
    %v868 = vpack.c.b16 %v682, %v676
    %v869 = vpack.c.b16 %v689, %v683
    %v870 = vpack.c.b16 %v690, %v684
    %v871 = vpack.c.b16 %v691, %v685
    %v872 = vpack.c.b16 %v692, %v686
    %v873 = vpack.c.b16 %v693, %v687
    %v874 = vpack.c.b16 %v694, %v688
    %v875 = vpack.c.b16 %v701, %v695
    %v876 = vpack.c.b16 %v702, %v696
    %v877 = vpack.c.b16 %v703, %v697
    %v878 = vpack.c.b16 %v704, %v698
    %v879 = vpack.c.b16 %v705, %v699
    %v880 = vpack.c.b16 %v706, %v700
    %v881 = vpack.c.b16 %v713, %v707
    %v882 = vpack.c.b16 %v714, %v708
    %v883 = vpack.c.b16 %v715, %v709
    %v884 = vpack.c.b16 %v716, %v710
    %v885 = vpack.c.b16 %v717, %v711
    %v886 = vpack.c.b16 %v718, %v712
    %v887 = vpack.c.b16 %v725, %v719
    %v888 = vpack.c.b16 %v726, %v720
    %v889 = vpack.c.b16 %v727, %v721
    %v890 = vpack.c.b16 %v728, %v722
    %v891 = vpack.c.b16 %v729, %v723
    %v892 = vpack.c.b16 %v730, %v724
    %v893 = vpack.c.b16 %v737, %v731
    %v894 = vpack.c.b16 %v738, %v732
    %v895 = vpack.c.b16 %v739, %v733
    %v896 = vpack.c.b16 %v740, %v734
    %v897 = vpack.c.b16 %v741, %v735
    %v898 = vpack.c.b16 %v742, %v736
    %v899 = vpack.c.b16 %v749, %v743
    %v900 = vpack.c.b16 %v750, %v744
    %v901 = vpack.c.b16 %v751, %v745
    %v902 = vpack.c.b16 %v752, %v746
    %v903 = vpack.c.b16 %v753, %v747
    %v904 = vpack.c.b16 %v754, %v748
    %v905 = vpack.c.b16 %v761, %v755
    %v906 = vpack.c.b16 %v762, %v756
    %v907 = vpack.c.b16 %v763, %v757
    %v908 = vpack.c.b16 %v764, %v758
    %v909 = vpack.c.b16 %v765, %v759
    %v910 = vpack.c.b16 %v766, %v760
    %v911 = vpack.c.b16 %v773, %v767
    %v912 = vpack.c.b16 %v774, %v768
    %v913 = vpack.c.b16 %v775, %v769
    %v914 = vpack.c.b16 %v776, %v770
    %v915 = vpack.c.b16 %v777, %v771
    %v916 = vpack.c.b16 %v778, %v772
    %v917 = vpack.c.b16 %v785, %v779
    %v918 = vpack.c.b16 %v786, %v780
    %v919 = vpack.c.b16 %v787, %v781
    %v920 = vpack.c.b16 %v788, %v782
    %v921 = vpack.c.b16 %v789, %v783
    %v922 = vpack.c.b16 %v790, %v784
    %v923 = vpack.c.b16 %v797, %v791
    %v924 = vpack.c.b16 %v798, %v792
    %v925 = vpack.c.b16 %v799, %v793
    %v926 = vpack.c.b16 %v800, %v794
    %v927 = vpack.c.b16 %v801, %v795
    %v928 = vpack.c.b16 %v802, %v796
    %v929 = vpack.c.b16 %v809, %v803
    %v930 = vpack.c.b16 %v810, %v804
    %v931 = vpack.c.b16 %v811, %v805
    %v932 = vpack.c.b16 %v812, %v806
    %v933 = vpack.c.b16 %v813, %v807
    %v934 = vpack.c.b16 %v814, %v808
    %v935 = vpack.c.b16 %v821, %v815
    %v936 = vpack.c.b16 %v822, %v816
    %v937 = vpack.c.b16 %v823, %v817
    %v938 = vpack.c.b16 %v824, %v818
    %v939 = vpack.c.b16 %v825, %v819
    %v940 = vpack.c.b16 %v826, %v820
    %v1151 = vunpack.c.l.b16 %v161
    %v1152 = vunpack.c.l.b16 %v162
    %v1153 = vunpack.c.l.b16 %v163
    %v1154 = vunpack.c.l.b16 %v164
    %v1155 = vunpack.c.l.b16 %v165
    %v1156 = vunpack.c.l.b16 %v166
    %v1157 = vunpack.c.l.b16 %v167
    %v1158 = vunpack.c.l.b16 %v168
    %v1159 = vunpack.c.l.b16 %v169
    %v1160 = vunpack.c.l.b16 %v170
    %v1161 = vunpack.c.l.b16 %v171
    %v1162 = vunpack.c.l.b16 %v172
    %v1163 = vunpack.c.l.b16 %v173
    %v1164 = vunpack.c.l.b16 %v174
    %v1165 = vunpack.c.l.b16 %v175
    %v1166 = vunpack.c.l.b16 %v176
    %v1167 = vunpack.c.l.b16 %v177
    %v1168 = vunpack.c.l.b16 %v178
    %v1169 = vunpack.c.l.b16 %v179
    %v1170 = vunpack.c.l.b16 %v180
    %v1171 = vunpack.c.l.b16 %v181
    %v1172 = vunpack.c.l.b16 %v182
    %v1173 = vunpack.c.l.b16 %v183
    %v1174 = vunpack.c.l.b16 %v184
    %v1175 = vunpack.c.l.b16 %v185
    %v1176 = vunpack.c.l.b16 %v186
    %v1177 = vunpack.c.l.b16 %v187
    %v1178 = vunpack.c.l.b16 %v188
    %v1179 = vunpack.c.l.b16 %v189
    %v1180 = vunpack.c.l.b16 %v190
    %v1181 = vunpack.c.l.b16 %v191
    %v1182 = vunpack.c.l.b16 %v192
    %v1183 = vunpack.c.l.b16 %v193
    %v1184 = vunpack.c.l.b16 %v194
    %v1185 = vunpack.c.l.b16 %v195
    %v1186 = vunpack.c.l.b16 %v196
    %v1187 = vunpack.c.l.b16 %v197
    %v1188 = vunpack.c.l.b16 %v198
    %v1189 = vunpack.c.l.b16 %v199
    %v1190 = vunpack.c.l.b16 %v200
    %v1191 = vunpack.c.l.b16 %v201
    %v1192 = vunpack.c.l.b16 %v202
    %v1193 = vunpack.c.l.b16 %v203
    %v1194 = vunpack.c.l.b16 %v204
    %v1195 = vunpack.c.l.b16 %v205
    %v1196 = vunpack.c.l.b16 %v206
    %v1197 = vunpack.c.l.b16 %v207
    %v1198 = vunpack.c.l.b16 %v208
    %v1199 = vunpack.c.l.b16 %v209
    %v1200 = vunpack.c.l.b16 %v210
    %v1201 = vunpack.c.l.b16 %v211
    %v1202 = vunpack.c.l.b16 %v212
    %v1203 = vunpack.c.l.b16 %v213
    %v1204 = vunpack.c.l.b16 %v214
    %v1205 = vunpack.c.l.b16 %v215
    %v1206 = vunpack.c.l.b16 %v216
    %v1207 = vunpack.c.l.b16 %v217
    %v1208 = vunpack.c.l.b16 %v218
    %v1209 = vunpack.c.l.b16 %v219
    %v1210 = vunpack.c.l.b16 %v220
    %v1211 = vunpack.c.l.b16 %v221
    %v1212 = vunpack.c.l.b16 %v222
    %v1213 = vunpack.c.l.b16 %v223
    %v1214 = vunpack.c.l.b16 %v224
    %v1215 = vunpack.c.l.b16 %v225
    %v1216 = vunpack.c.l.b16 %v226
    %v1217 = vunpack.c.l.b16 %v227
    %v1218 = vunpack.c.l.b16 %v228
    %v1219 = vunpack.c.l.b16 %v229
    %v1220 = vunpack.c.l.b16 %v230
    %v1221 = vunpack.c.l.b16 %v231
    %v1222 = vunpack.c.l.b16 %v232
    %v1223 = vunpack.c.l.b16 %v233
    %v1224 = vunpack.c.l.b16 %v234
    %v1225 = vunpack.c.l.b16 %v235
    %v1226 = vunpack.c.l.b16 %v236
    %v1227 = vunpack.c.l.b16 %v237
    %v1228 = vunpack.c.l.b16 %v238
    %v1229 = vunpack.c.l.b16 %v239
    %v1230 = vunpack.c.l.b16 %v240
    %v1231 = vunpack.c.l.b16 %v241
    %v1232 = vunpack.c.l.b16 %v242
    %v1233 = vunpack.c.l.b16 %v243
    %v1234 = vunpack.c.l.b16 %v244
    %v1235 = vunpack.c.l.b16 %v245
    %v1236 = vunpack.c.l.b16 %v246
    %v1237 = vunpack.c.l.b16 %v247
    %v1238 = vunpack.c.l.b16 %v248
    %v1239 = vunpack.c.l.b16 %v249
    %v1240 = vunpack.c.l.b16 %v250
    %v1241 = vunpack.c.l.b16 %v251
    %v1242 = vunpack.c.l.b16 %v252
    %v1243 = vunpack.c.l.b16 %v253
    %v1244 = vunpack.c.l.b16 %v254
    %v1245 = vunpack.c.l.b16 %v255
    %v1246 = vunpack.c.l.b16 %v256
    %v1247 = vpack.c.b16 %v1152, %v1151
    %v1248 = vpack.c.b16 %v1154, %v1153
    %v1249 = vpack.c.b16 %v1156, %v1155
    %v1250 = vpack.c.b16 %v1158, %v1157
    %v1251 = vpack.c.b16 %v1160, %v1159
    %v1252 = vpack.c.b16 %v1162, %v1161
    %v1253 = vpack.c.b16 %v1164, %v1163
    %v1254 = vpack.c.b16 %v1166, %v1165
    %v1255 = vpack.c.b16 %v1168, %v1167
    %v1256 = vpack.c.b16 %v1170, %v1169
    %v1257 = vpack.c.b16 %v1172, %v1171
    %v1258 = vpack.c.b16 %v1174, %v1173
    %v1259 = vpack.c.b16 %v1176, %v1175
    %v1260 = vpack.c.b16 %v1178, %v1177
    %v1261 = vpack.c.b16 %v1180, %v1179
    %v1262 = vpack.c.b16 %v1182, %v1181
    %v1263 = vpack.c.b16 %v1184, %v1183
    %v1264 = vpack.c.b16 %v1186, %v1185
    %v1265 = vpack.c.b16 %v1188, %v1187
    %v1266 = vpack.c.b16 %v1190, %v1189
    %v1267 = vpack.c.b16 %v1192, %v1191
    %v1268 = vpack.c.b16 %v1194, %v1193
    %v1269 = vpack.c.b16 %v1196, %v1195
    %v1270 = vpack.c.b16 %v1198, %v1197
    %v1271 = vpack.c.b16 %v1200, %v1199
    %v1272 = vpack.c.b16 %v1202, %v1201
    %v1273 = vpack.c.b16 %v1204, %v1203
    %v1274 = vpack.c.b16 %v1206, %v1205
    %v1275 = vpack.c.b16 %v1208, %v1207
    %v1276 = vpack.c.b16 %v1210, %v1209
    %v1277 = vpack.c.b16 %v1212, %v1211
    %v1278 = vpack.c.b16 %v1214, %v1213
    %v1279 = vpack.c.b16 %v1216, %v1215
    %v1280 = vpack.c.b16 %v1218, %v1217
    %v1281 = vpack.c.b16 %v1220, %v1219
    %v1282 = vpack.c.b16 %v1222, %v1221
    %v1283 = vpack.c.b16 %v1224, %v1223
    %v1284 = vpack.c.b16 %v1226, %v1225
    %v1285 = vpack.c.b16 %v1228, %v1227
    %v1286 = vpack.c.b16 %v1230, %v1229
    %v1287 = vpack.c.b16 %v1232, %v1231
    %v1288 = vpack.c.b16 %v1234, %v1233
    %v1289 = vpack.c.b16 %v1236, %v1235
    %v1290 = vpack.c.b16 %v1238, %v1237
    %v1291 = vpack.c.b16 %v1240, %v1239
    %v1292 = vpack.c.b16 %v1242, %v1241
    %v1293 = vpack.c.b16 %v1244, %v1243
    %v1294 = vpack.c.b16 %v1246, %v1245
    %1343 = vmatpush.bf16.msra.mxu0 %v1254
    %1344 = vmatpush.bf16.msra.mxu0 %v1253
    %1345 = vmatpush.bf16.msra.mxu0 %v1252
    %1346 = vmatpush.bf16.msra.mxu0 %v1251
    %1347 = vmatpush.bf16.msra.mxu0 %v1250
    %1348 = vmatpush.bf16.msra.mxu0 %v1249
    %1349 = vmatpush.bf16.msra.mxu0 %v1248
    %1350 = vmatpush.bf16.msra.mxu0 %v1247
    %1351 = vmatmul.bf16.gmra.mxu0 %v827
    %v1352 = vpop.f32.mrf.mxu0
    %v1353 = vadd.f32 %v298, %v1352
    %v1354 = vpop.f32.mrf.mxu0
    %v1355 = vadd.f32 %v303, %v1354
    %1356 = vmatmul.bf16.gmra.mxu0 %v833
    %v1357 = vpop.f32.mrf.mxu0
    %v1358 = vadd.f32 %v308, %v1357
    %v1359 = vpop.f32.mrf.mxu0
    %v1360 = vadd.f32 %v313, %v1359
    %1361 = vmatmul.bf16.gmra.mxu0 %v839
    %v1362 = vpop.f32.mrf.mxu0
    %v1363 = vadd.f32 %v318, %v1362
    %v1364 = vpop.f32.mrf.mxu0
    %v1365 = vadd.f32 %v323, %v1364
    %1366 = vmatmul.bf16.gmra.mxu0 %v845
    %v1367 = vpop.f32.mrf.mxu0
    %v1368 = vadd.f32 %v328, %v1367
    %v1369 = vpop.f32.mrf.mxu0
    %v1370 = vadd.f32 %v333, %v1369
    %1371 = vmatmul.bf16.gmra.mxu0 %v851
    %v1372 = vpop.f32.mrf.mxu0
    %v1373 = vadd.f32 %v338, %v1372
    %v1374 = vpop.f32.mrf.mxu0
    %v1375 = vadd.f32 %v343, %v1374
    %1376 = vmatmul.bf16.gmra.mxu0 %v857
    %v1377 = vpop.f32.mrf.mxu0
    %v1378 = vadd.f32 %v348, %v1377
    %v1379 = vpop.f32.mrf.mxu0
    %v1380 = vadd.f32 %v353, %v1379
    %1381 = vmatmul.bf16.gmra.mxu0 %v863
    %v1382 = vpop.f32.mrf.mxu0
    %v1383 = vadd.f32 %v358, %v1382
    %v1384 = vpop.f32.mrf.mxu0
    %v1385 = vadd.f32 %v363, %v1384
    %1386 = vmatmul.bf16.gmra.mxu0 %v869
    %v1387 = vpop.f32.mrf.mxu0
    %v1388 = vadd.f32 %v368, %v1387
    %v1389 = vpop.f32.mrf.mxu0
    %v1390 = vadd.f32 %v373, %v1389
    %1391 = vmatmul.bf16.gmra.mxu0 %v875
    %v1392 = vpop.f32.mrf.mxu0
    %v1393 = vadd.f32 %v378, %v1392
    %v1394 = vpop.f32.mrf.mxu0
    %v1395 = vadd.f32 %v383, %v1394
    %1396 = vmatmul.bf16.gmra.mxu0 %v881
    %v1397 = vpop.f32.mrf.mxu0
    %v1398 = vadd.f32 %v388, %v1397
    %v1399 = vpop.f32.mrf.mxu0
    %v1400 = vadd.f32 %v393, %v1399
    %1401 = vmatmul.bf16.gmra.mxu0 %v887
    %v1402 = vpop.f32.mrf.mxu0
    %v1403 = vadd.f32 %v398, %v1402
    %v1404 = vpop.f32.mrf.mxu0
    %v1405 = vadd.f32 %v403, %v1404
    %1406 = vmatmul.bf16.gmra.mxu0 %v893
    %v1407 = vpop.f32.mrf.mxu0
    %v1408 = vadd.f32 %v408, %v1407
    %v1409 = vpop.f32.mrf.mxu0
    %v1410 = vadd.f32 %v413, %v1409
    %1411 = vmatmul.bf16.gmra.mxu0 %v899
    %v1412 = vpop.f32.mrf.mxu0
    %v1413 = vadd.f32 %v418, %v1412
    %v1414 = vpop.f32.mrf.mxu0
    %v1415 = vadd.f32 %v423, %v1414
    %1416 = vmatmul.bf16.gmra.mxu0 %v905
    %v1417 = vpop.f32.mrf.mxu0
    %v1418 = vadd.f32 %v428, %v1417
    %v1419 = vpop.f32.mrf.mxu0
    %v1420 = vadd.f32 %v433, %v1419
    %1421 = vmatmul.bf16.gmra.mxu0 %v911
    %v1422 = vpop.f32.mrf.mxu0
    %v1423 = vadd.f32 %v438, %v1422
    %v1424 = vpop.f32.mrf.mxu0
    %v1425 = vadd.f32 %v443, %v1424
    %1426 = vmatmul.bf16.gmra.mxu0 %v917
    %v1427 = vpop.f32.mrf.mxu0
    %v1428 = vadd.f32 %v448, %v1427
    %v1429 = vpop.f32.mrf.mxu0
    %v1430 = vadd.f32 %v453, %v1429
    %1431 = vmatmul.bf16.gmra.mxu0 %v923
    %v1432 = vpop.f32.mrf.mxu0
    %v1433 = vadd.f32 %v458, %v1432
    %v1434 = vpop.f32.mrf.mxu0
    %v1435 = vadd.f32 %v463, %v1434
    %1436 = vmatmul.bf16.gmra.mxu0 %v929
    %v1437 = vpop.f32.mrf.mxu0
    %v1438 = vadd.f32 %v468, %v1437
    %v1439 = vpop.f32.mrf.mxu0
    %v1440 = vadd.f32 %v473, %v1439
    %1441 = vmatmul.bf16.gmra.mxu0 %v935
    %v1442 = vpop.f32.mrf.mxu0
    %v1443 = vadd.f32 %v478, %v1442
    %v1444 = vpop.f32.mrf.mxu0
    %v1445 = vadd.f32 %v483, %v1444
    %1446 = vdwg.mxu0
    %1447 = vmatpush.bf16.msra.mxu0 %v1262
    %1448 = vmatpush.bf16.msra.mxu0 %v1261
    %1449 = vmatpush.bf16.msra.mxu0 %v1260
    %1450 = vmatpush.bf16.msra.mxu0 %v1259
    %1451 = vmatpush.bf16.msra.mxu0 %v1258
    %1452 = vmatpush.bf16.msra.mxu0 %v1257
    %1453 = vmatpush.bf16.msra.mxu0 %v1256
    %1454 = vmatpush.bf16.msra.mxu0 %v1255
    %1455 = vmatmul.bf16.gmra.mxu0 %v828
    %v1456 = vpop.f32.mrf.mxu0
    %v1457 = vadd.f32 %v1353, %v1456
    %v1458 = vpop.f32.mrf.mxu0
    %v1459 = vadd.f32 %v1355, %v1458
    %1460 = vmatmul.bf16.gmra.mxu0 %v834
    %v1461 = vpop.f32.mrf.mxu0
    %v1462 = vadd.f32 %v1358, %v1461
    %v1463 = vpop.f32.mrf.mxu0
    %v1464 = vadd.f32 %v1360, %v1463
    %1465 = vmatmul.bf16.gmra.mxu0 %v840
    %v1466 = vpop.f32.mrf.mxu0
    %v1467 = vadd.f32 %v1363, %v1466
    %v1468 = vpop.f32.mrf.mxu0
    %v1469 = vadd.f32 %v1365, %v1468
    %1470 = vmatmul.bf16.gmra.mxu0 %v846
    %v1471 = vpop.f32.mrf.mxu0
    %v1472 = vadd.f32 %v1368, %v1471
    %v1473 = vpop.f32.mrf.mxu0
    %v1474 = vadd.f32 %v1370, %v1473
    %1475 = vmatmul.bf16.gmra.mxu0 %v852
    %v1476 = vpop.f32.mrf.mxu0
    %v1477 = vadd.f32 %v1373, %v1476
    %v1478 = vpop.f32.mrf.mxu0
    %v1479 = vadd.f32 %v1375, %v1478
    %1480 = vmatmul.bf16.gmra.mxu0 %v858
    %v1481 = vpop.f32.mrf.mxu0
    %v1482 = vadd.f32 %v1378, %v1481
    %v1483 = vpop.f32.mrf.mxu0
    %v1484 = vadd.f32 %v1380, %v1483
    %1485 = vmatmul.bf16.gmra.mxu0 %v864
    %v1486 = vpop.f32.mrf.mxu0
    %v1487 = vadd.f32 %v1383, %v1486
    %v1488 = vpop.f32.mrf.mxu0
    %v1489 = vadd.f32 %v1385, %v1488
    %1490 = vmatmul.bf16.gmra.mxu0 %v870
    %v1491 = vpop.f32.mrf.mxu0
    %v1492 = vadd.f32 %v1388, %v1491
    %v1493 = vpop.f32.mrf.mxu0
    %v1494 = vadd.f32 %v1390, %v1493
    %1495 = vmatmul.bf16.gmra.mxu0 %v876
    %v1496 = vpop.f32.mrf.mxu0
    %v1497 = vadd.f32 %v1393, %v1496
    %v1498 = vpop.f32.mrf.mxu0
    %v1499 = vadd.f32 %v1395, %v1498
    %1500 = vmatmul.bf16.gmra.mxu0 %v882
    %v1501 = vpop.f32.mrf.mxu0
    %v1502 = vadd.f32 %v1398, %v1501
    %v1503 = vpop.f32.mrf.mxu0
    %v1504 = vadd.f32 %v1400, %v1503
    %1505 = vmatmul.bf16.gmra.mxu0 %v888
    %v1506 = vpop.f32.mrf.mxu0
    %v1507 = vadd.f32 %v1403, %v1506
    %v1508 = vpop.f32.mrf.mxu0
    %v1509 = vadd.f32 %v1405, %v1508
    %1510 = vmatmul.bf16.gmra.mxu0 %v894
    %v1511 = vpop.f32.mrf.mxu0
    %v1512 = vadd.f32 %v1408, %v1511
    %v1513 = vpop.f32.mrf.mxu0
    %v1514 = vadd.f32 %v1410, %v1513
    %1515 = vmatmul.bf16.gmra.mxu0 %v900
    %v1516 = vpop.f32.mrf.mxu0
    %v1517 = vadd.f32 %v1413, %v1516
    %v1518 = vpop.f32.mrf.mxu0
    %v1519 = vadd.f32 %v1415, %v1518
    %1520 = vmatmul.bf16.gmra.mxu0 %v906
    %v1521 = vpop.f32.mrf.mxu0
    %v1522 = vadd.f32 %v1418, %v1521
    %v1523 = vpop.f32.mrf.mxu0
    %v1524 = vadd.f32 %v1420, %v1523
    %1525 = vmatmul.bf16.gmra.mxu0 %v912
    %v1526 = vpop.f32.mrf.mxu0
    %v1527 = vadd.f32 %v1423, %v1526
    %v1528 = vpop.f32.mrf.mxu0
    %v1529 = vadd.f32 %v1425, %v1528
    %1530 = vmatmul.bf16.gmra.mxu0 %v918
    %v1531 = vpop.f32.mrf.mxu0
    %v1532 = vadd.f32 %v1428, %v1531
    %v1533 = vpop.f32.mrf.mxu0
    %v1534 = vadd.f32 %v1430, %v1533
    %1535 = vmatmul.bf16.gmra.mxu0 %v924
    %v1536 = vpop.f32.mrf.mxu0
    %v1537 = vadd.f32 %v1433, %v1536
    %v1538 = vpop.f32.mrf.mxu0
    %v1539 = vadd.f32 %v1435, %v1538
    %1540 = vmatmul.bf16.gmra.mxu0 %v930
    %v1541 = vpop.f32.mrf.mxu0
    %v1542 = vadd.f32 %v1438, %v1541
    %v1543 = vpop.f32.mrf.mxu0
    %v1544 = vadd.f32 %v1440, %v1543
    %1545 = vmatmul.bf16.gmra.mxu0 %v936
    %v1546 = vpop.f32.mrf.mxu0
    %v1547 = vadd.f32 %v1443, %v1546
    %v1548 = vpop.f32.mrf.mxu0
    %v1549 = vadd.f32 %v1445, %v1548
    %1550 = vdwg.mxu0
    %1551 = vmatpush.bf16.msra.mxu0 %v1270
    %1552 = vmatpush.bf16.msra.mxu0 %v1269
    %1553 = vmatpush.bf16.msra.mxu0 %v1268
    %1554 = vmatpush.bf16.msra.mxu0 %v1267
    %1555 = vmatpush.bf16.msra.mxu0 %v1266
    %1556 = vmatpush.bf16.msra.mxu0 %v1265
    %1557 = vmatpush.bf16.msra.mxu0 %v1264
    %1558 = vmatpush.bf16.msra.mxu0 %v1263
    %1559 = vmatmul.bf16.gmra.mxu0 %v829
    %v1560 = vpop.f32.mrf.mxu0
    %v1561 = vadd.f32 %v1457, %v1560
    %v1562 = vpop.f32.mrf.mxu0
    %v1563 = vadd.f32 %v1459, %v1562
    %1564 = vmatmul.bf16.gmra.mxu0 %v835
    %v1565 = vpop.f32.mrf.mxu0
    %v1566 = vadd.f32 %v1462, %v1565
    %v1567 = vpop.f32.mrf.mxu0
    %v1568 = vadd.f32 %v1464, %v1567
    %1569 = vmatmul.bf16.gmra.mxu0 %v841
    %v1570 = vpop.f32.mrf.mxu0
    %v1571 = vadd.f32 %v1467, %v1570
    %v1572 = vpop.f32.mrf.mxu0
    %v1573 = vadd.f32 %v1469, %v1572
    %1574 = vmatmul.bf16.gmra.mxu0 %v847
    %v1575 = vpop.f32.mrf.mxu0
    %v1576 = vadd.f32 %v1472, %v1575
    %v1577 = vpop.f32.mrf.mxu0
    %v1578 = vadd.f32 %v1474, %v1577
    %1579 = vmatmul.bf16.gmra.mxu0 %v853
    %v1580 = vpop.f32.mrf.mxu0
    %v1581 = vadd.f32 %v1477, %v1580
    %v1582 = vpop.f32.mrf.mxu0
    %v1583 = vadd.f32 %v1479, %v1582
    %1584 = vmatmul.bf16.gmra.mxu0 %v859
    %v1585 = vpop.f32.mrf.mxu0
    %v1586 = vadd.f32 %v1482, %v1585
    %v1587 = vpop.f32.mrf.mxu0
    %v1588 = vadd.f32 %v1484, %v1587
    %1589 = vmatmul.bf16.gmra.mxu0 %v865
    %v1590 = vpop.f32.mrf.mxu0
    %v1591 = vadd.f32 %v1487, %v1590
    %v1592 = vpop.f32.mrf.mxu0
    %v1593 = vadd.f32 %v1489, %v1592
    %1594 = vmatmul.bf16.gmra.mxu0 %v871
    %v1595 = vpop.f32.mrf.mxu0
    %v1596 = vadd.f32 %v1492, %v1595
    %v1597 = vpop.f32.mrf.mxu0
    %v1598 = vadd.f32 %v1494, %v1597
    %1599 = vmatmul.bf16.gmra.mxu0 %v877
    %v1600 = vpop.f32.mrf.mxu0
    %v1601 = vadd.f32 %v1497, %v1600
    %v1602 = vpop.f32.mrf.mxu0
    %v1603 = vadd.f32 %v1499, %v1602
    %1604 = vmatmul.bf16.gmra.mxu0 %v883
    %v1605 = vpop.f32.mrf.mxu0
    %v1606 = vadd.f32 %v1502, %v1605
    %v1607 = vpop.f32.mrf.mxu0
    %v1608 = vadd.f32 %v1504, %v1607
    %1609 = vmatmul.bf16.gmra.mxu0 %v889
    %v1610 = vpop.f32.mrf.mxu0
    %v1611 = vadd.f32 %v1507, %v1610
    %v1612 = vpop.f32.mrf.mxu0
    %v1613 = vadd.f32 %v1509, %v1612
    %1614 = vmatmul.bf16.gmra.mxu0 %v895
    %v1615 = vpop.f32.mrf.mxu0
    %v1616 = vadd.f32 %v1512, %v1615
    %v1617 = vpop.f32.mrf.mxu0
    %v1618 = vadd.f32 %v1514, %v1617
    %1619 = vmatmul.bf16.gmra.mxu0 %v901
    %v1620 = vpop.f32.mrf.mxu0
    %v1621 = vadd.f32 %v1517, %v1620
    %v1622 = vpop.f32.mrf.mxu0
    %v1623 = vadd.f32 %v1519, %v1622
    %1624 = vmatmul.bf16.gmra.mxu0 %v907
    %v1625 = vpop.f32.mrf.mxu0
    %v1626 = vadd.f32 %v1522, %v1625
    %v1627 = vpop.f32.mrf.mxu0
    %v1628 = vadd.f32 %v1524, %v1627
    %1629 = vmatmul.bf16.gmra.mxu0 %v913
    %v1630 = vpop.f32.mrf.mxu0
    %v1631 = vadd.f32 %v1527, %v1630
    %v1632 = vpop.f32.mrf.mxu0
    %v1633 = vadd.f32 %v1529, %v1632
    %1634 = vmatmul.bf16.gmra.mxu0 %v919
    %v1635 = vpop.f32.mrf.mxu0
    %v1636 = vadd.f32 %v1532, %v1635
    %v1637 = vpop.f32.mrf.mxu0
    %v1638 = vadd.f32 %v1534, %v1637
    %1639 = vmatmul.bf16.gmra.mxu0 %v925
    %v1640 = vpop.f32.mrf.mxu0
    %v1641 = vadd.f32 %v1537, %v1640
    %v1642 = vpop.f32.mrf.mxu0
    %v1643 = vadd.f32 %v1539, %v1642
    %1644 = vmatmul.bf16.gmra.mxu0 %v931
    %v1645 = vpop.f32.mrf.mxu0
    %v1646 = vadd.f32 %v1542, %v1645
    %v1647 = vpop.f32.mrf.mxu0
    %v1648 = vadd.f32 %v1544, %v1647
    %1649 = vmatmul.bf16.gmra.mxu0 %v937
    %v1650 = vpop.f32.mrf.mxu0
    %v1651 = vadd.f32 %v1547, %v1650
    %v1652 = vpop.f32.mrf.mxu0
    %v1653 = vadd.f32 %v1549, %v1652
    %1654 = vdwg.mxu0
    %1655 = vmatpush.bf16.msra.mxu0 %v1278
    %1656 = vmatpush.bf16.msra.mxu0 %v1277
    %1657 = vmatpush.bf16.msra.mxu0 %v1276
    %1658 = vmatpush.bf16.msra.mxu0 %v1275
    %1659 = vmatpush.bf16.msra.mxu0 %v1274
    %1660 = vmatpush.bf16.msra.mxu0 %v1273
    %1661 = vmatpush.bf16.msra.mxu0 %v1272
    %1662 = vmatpush.bf16.msra.mxu0 %v1271
    %1663 = vmatmul.bf16.gmra.mxu0 %v830
    %v1664 = vpop.f32.mrf.mxu0
    %v1665 = vadd.f32 %v1561, %v1664
    %v1666 = vpop.f32.mrf.mxu0
    %v1667 = vadd.f32 %v1563, %v1666
    %1668 = vmatmul.bf16.gmra.mxu0 %v836
    %v1669 = vpop.f32.mrf.mxu0
    %v1670 = vadd.f32 %v1566, %v1669
    %v1671 = vpop.f32.mrf.mxu0
    %v1672 = vadd.f32 %v1568, %v1671
    %1673 = vmatmul.bf16.gmra.mxu0 %v842
    %v1674 = vpop.f32.mrf.mxu0
    %v1675 = vadd.f32 %v1571, %v1674
    %v1676 = vpop.f32.mrf.mxu0
    %v1677 = vadd.f32 %v1573, %v1676
    %1678 = vmatmul.bf16.gmra.mxu0 %v848
    %v1679 = vpop.f32.mrf.mxu0
    %v1680 = vadd.f32 %v1576, %v1679
    %v1681 = vpop.f32.mrf.mxu0
    %v1682 = vadd.f32 %v1578, %v1681
    %1683 = vmatmul.bf16.gmra.mxu0 %v854
    %v1684 = vpop.f32.mrf.mxu0
    %v1685 = vadd.f32 %v1581, %v1684
    %v1686 = vpop.f32.mrf.mxu0
    %v1687 = vadd.f32 %v1583, %v1686
    %1688 = vmatmul.bf16.gmra.mxu0 %v860
    %v1689 = vpop.f32.mrf.mxu0
    %v1690 = vadd.f32 %v1586, %v1689
    %v1691 = vpop.f32.mrf.mxu0
    %v1692 = vadd.f32 %v1588, %v1691
    %1693 = vmatmul.bf16.gmra.mxu0 %v866
    %v1694 = vpop.f32.mrf.mxu0
    %v1695 = vadd.f32 %v1591, %v1694
    %v1696 = vpop.f32.mrf.mxu0
    %v1697 = vadd.f32 %v1593, %v1696
    %1698 = vmatmul.bf16.gmra.mxu0 %v872
    %v1699 = vpop.f32.mrf.mxu0
    %v1700 = vadd.f32 %v1596, %v1699
    %v1701 = vpop.f32.mrf.mxu0
    %v1702 = vadd.f32 %v1598, %v1701
    %1703 = vmatmul.bf16.gmra.mxu0 %v878
    %v1704 = vpop.f32.mrf.mxu0
    %v1705 = vadd.f32 %v1601, %v1704
    %v1706 = vpop.f32.mrf.mxu0
    %v1707 = vadd.f32 %v1603, %v1706
    %1708 = vmatmul.bf16.gmra.mxu0 %v884
    %v1709 = vpop.f32.mrf.mxu0
    %v1710 = vadd.f32 %v1606, %v1709
    %v1711 = vpop.f32.mrf.mxu0
    %v1712 = vadd.f32 %v1608, %v1711
    %1713 = vmatmul.bf16.gmra.mxu0 %v890
    %v1714 = vpop.f32.mrf.mxu0
    %v1715 = vadd.f32 %v1611, %v1714
    %v1716 = vpop.f32.mrf.mxu0
    %v1717 = vadd.f32 %v1613, %v1716
    %1718 = vmatmul.bf16.gmra.mxu0 %v896
    %v1719 = vpop.f32.mrf.mxu0
    %v1720 = vadd.f32 %v1616, %v1719
    %v1721 = vpop.f32.mrf.mxu0
    %v1722 = vadd.f32 %v1618, %v1721
    %1723 = vmatmul.bf16.gmra.mxu0 %v902
    %v1724 = vpop.f32.mrf.mxu0
    %v1725 = vadd.f32 %v1621, %v1724
    %v1726 = vpop.f32.mrf.mxu0
    %v1727 = vadd.f32 %v1623, %v1726
    %1728 = vmatmul.bf16.gmra.mxu0 %v908
    %v1729 = vpop.f32.mrf.mxu0
    %v1730 = vadd.f32 %v1626, %v1729
    %v1731 = vpop.f32.mrf.mxu0
    %v1732 = vadd.f32 %v1628, %v1731
    %1733 = vmatmul.bf16.gmra.mxu0 %v914
    %v1734 = vpop.f32.mrf.mxu0
    %v1735 = vadd.f32 %v1631, %v1734
    %v1736 = vpop.f32.mrf.mxu0
    %v1737 = vadd.f32 %v1633, %v1736
    %1738 = vmatmul.bf16.gmra.mxu0 %v920
    %v1739 = vpop.f32.mrf.mxu0
    %v1740 = vadd.f32 %v1636, %v1739
    %v1741 = vpop.f32.mrf.mxu0
    %v1742 = vadd.f32 %v1638, %v1741
    %1743 = vmatmul.bf16.gmra.mxu0 %v926
    %v1744 = vpop.f32.mrf.mxu0
    %v1745 = vadd.f32 %v1641, %v1744
    %v1746 = vpop.f32.mrf.mxu0
    %v1747 = vadd.f32 %v1643, %v1746
    %1748 = vmatmul.bf16.gmra.mxu0 %v932
    %v1749 = vpop.f32.mrf.mxu0
    %v1750 = vadd.f32 %v1646, %v1749
    %v1751 = vpop.f32.mrf.mxu0
    %v1752 = vadd.f32 %v1648, %v1751
    %1753 = vmatmul.bf16.gmra.mxu0 %v938
    %v1754 = vpop.f32.mrf.mxu0
    %v1755 = vadd.f32 %v1651, %v1754
    %v1756 = vpop.f32.mrf.mxu0
    %v1757 = vadd.f32 %v1653, %v1756
    %1758 = vdwg.mxu0
    %1759 = vmatpush.bf16.msra.mxu0 %v1286
    %1760 = vmatpush.bf16.msra.mxu0 %v1285
    %1761 = vmatpush.bf16.msra.mxu0 %v1284
    %1762 = vmatpush.bf16.msra.mxu0 %v1283
    %1763 = vmatpush.bf16.msra.mxu0 %v1282
    %1764 = vmatpush.bf16.msra.mxu0 %v1281
    %1765 = vmatpush.bf16.msra.mxu0 %v1280
    %1766 = vmatpush.bf16.msra.mxu0 %v1279
    %1767 = vmatmul.bf16.gmra.mxu0 %v831
    %v1768 = vpop.f32.mrf.mxu0
    %v1769 = vadd.f32 %v1665, %v1768
    %v1770 = vpop.f32.mrf.mxu0
    %v1771 = vadd.f32 %v1667, %v1770
    %1772 = vmatmul.bf16.gmra.mxu0 %v837
    %v1773 = vpop.f32.mrf.mxu0
    %v1774 = vadd.f32 %v1670, %v1773
    %v1775 = vpop.f32.mrf.mxu0
    %v1776 = vadd.f32 %v1672, %v1775
    %1777 = vmatmul.bf16.gmra.mxu0 %v843
    %v1778 = vpop.f32.mrf.mxu0
    %v1779 = vadd.f32 %v1675, %v1778
    %v1780 = vpop.f32.mrf.mxu0
    %v1781 = vadd.f32 %v1677, %v1780
    %1782 = vmatmul.bf16.gmra.mxu0 %v849
    %v1783 = vpop.f32.mrf.mxu0
    %v1784 = vadd.f32 %v1680, %v1783
    %v1785 = vpop.f32.mrf.mxu0
    %v1786 = vadd.f32 %v1682, %v1785
    %1787 = vmatmul.bf16.gmra.mxu0 %v855
    %v1788 = vpop.f32.mrf.mxu0
    %v1789 = vadd.f32 %v1685, %v1788
    %v1790 = vpop.f32.mrf.mxu0
    %v1791 = vadd.f32 %v1687, %v1790
    %1792 = vmatmul.bf16.gmra.mxu0 %v861
    %v1793 = vpop.f32.mrf.mxu0
    %v1794 = vadd.f32 %v1690, %v1793
    %v1795 = vpop.f32.mrf.mxu0
    %v1796 = vadd.f32 %v1692, %v1795
    %1797 = vmatmul.bf16.gmra.mxu0 %v867
    %v1798 = vpop.f32.mrf.mxu0
    %v1799 = vadd.f32 %v1695, %v1798
    %v1800 = vpop.f32.mrf.mxu0
    %v1801 = vadd.f32 %v1697, %v1800
    %1802 = vmatmul.bf16.gmra.mxu0 %v873
    %v1803 = vpop.f32.mrf.mxu0
    %v1804 = vadd.f32 %v1700, %v1803
    %v1805 = vpop.f32.mrf.mxu0
    %v1806 = vadd.f32 %v1702, %v1805
    %1807 = vmatmul.bf16.gmra.mxu0 %v879
    %v1808 = vpop.f32.mrf.mxu0
    %v1809 = vadd.f32 %v1705, %v1808
    %v1810 = vpop.f32.mrf.mxu0
    %v1811 = vadd.f32 %v1707, %v1810
    %1812 = vmatmul.bf16.gmra.mxu0 %v885
    %v1813 = vpop.f32.mrf.mxu0
    %v1814 = vadd.f32 %v1710, %v1813
    %v1815 = vpop.f32.mrf.mxu0
    %v1816 = vadd.f32 %v1712, %v1815
    %1817 = vmatmul.bf16.gmra.mxu0 %v891
    %v1818 = vpop.f32.mrf.mxu0
    %v1819 = vadd.f32 %v1715, %v1818
    %v1820 = vpop.f32.mrf.mxu0
    %v1821 = vadd.f32 %v1717, %v1820
    %1822 = vmatmul.bf16.gmra.mxu0 %v897
    %v1823 = vpop.f32.mrf.mxu0
    %v1824 = vadd.f32 %v1720, %v1823
    %v1825 = vpop.f32.mrf.mxu0
    %v1826 = vadd.f32 %v1722, %v1825
    %1827 = vmatmul.bf16.gmra.mxu0 %v903
    %v1828 = vpop.f32.mrf.mxu0
    %v1829 = vadd.f32 %v1725, %v1828
    %v1830 = vpop.f32.mrf.mxu0
    %v1831 = vadd.f32 %v1727, %v1830
    %1832 = vmatmul.bf16.gmra.mxu0 %v909
    %v1833 = vpop.f32.mrf.mxu0
    %v1834 = vadd.f32 %v1730, %v1833
    %v1835 = vpop.f32.mrf.mxu0
    %v1836 = vadd.f32 %v1732, %v1835
    %1837 = vmatmul.bf16.gmra.mxu0 %v915
    %v1838 = vpop.f32.mrf.mxu0
    %v1839 = vadd.f32 %v1735, %v1838
    %v1840 = vpop.f32.mrf.mxu0
    %v1841 = vadd.f32 %v1737, %v1840
    %1842 = vmatmul.bf16.gmra.mxu0 %v921
    %v1843 = vpop.f32.mrf.mxu0
    %v1844 = vadd.f32 %v1740, %v1843
    %v1845 = vpop.f32.mrf.mxu0
    %v1846 = vadd.f32 %v1742, %v1845
    %1847 = vmatmul.bf16.gmra.mxu0 %v927
    %v1848 = vpop.f32.mrf.mxu0
    %v1849 = vadd.f32 %v1745, %v1848
    %v1850 = vpop.f32.mrf.mxu0
    %v1851 = vadd.f32 %v1747, %v1850
    %1852 = vmatmul.bf16.gmra.mxu0 %v933
    %v1853 = vpop.f32.mrf.mxu0
    %v1854 = vadd.f32 %v1750, %v1853
    %v1855 = vpop.f32.mrf.mxu0
    %v1856 = vadd.f32 %v1752, %v1855
    %1857 = vmatmul.bf16.gmra.mxu0 %v939
    %v1858 = vpop.f32.mrf.mxu0
    %v1859 = vadd.f32 %v1755, %v1858
    %v1860 = vpop.f32.mrf.mxu0
    %v1861 = vadd.f32 %v1757, %v1860
    %1862 = vdwg.mxu0
    %1863 = vmatpush.bf16.msra.mxu0 %v1294
    %1864 = vmatpush.bf16.msra.mxu0 %v1293
    %1865 = vmatpush.bf16.msra.mxu0 %v1292
    %1866 = vmatpush.bf16.msra.mxu0 %v1291
    %1867 = vmatpush.bf16.msra.mxu0 %v1290
    %1868 = vmatpush.bf16.msra.mxu0 %v1289
    %1869 = vmatpush.bf16.msra.mxu0 %v1288
    %1870 = vmatpush.bf16.msra.mxu0 %v1287
    %1871 = vmatmul.bf16.gmra.mxu0 %v832
    %v1872 = vpop.f32.mrf.mxu0
    %v1873 = vadd.f32 %v1769, %v1872
    %v1874 = vpop.f32.mrf.mxu0
    %v1875 = vadd.f32 %v1771, %v1874
    %1876 = vmatmul.bf16.gmra.mxu0 %v838
    %v1877 = vpop.f32.mrf.mxu0
    %v1878 = vadd.f32 %v1774, %v1877
    %v1879 = vpop.f32.mrf.mxu0
    %v1880 = vadd.f32 %v1776, %v1879
    %1881 = vmatmul.bf16.gmra.mxu0 %v844
    %v1882 = vpop.f32.mrf.mxu0
    %v1883 = vadd.f32 %v1779, %v1882
    %v1884 = vpop.f32.mrf.mxu0
    %v1885 = vadd.f32 %v1781, %v1884
    %1886 = vmatmul.bf16.gmra.mxu0 %v850
    %v1887 = vpop.f32.mrf.mxu0
    %v1888 = vadd.f32 %v1784, %v1887
    %v1889 = vpop.f32.mrf.mxu0
    %v1890 = vadd.f32 %v1786, %v1889
    %1891 = vmatmul.bf16.gmra.mxu0 %v856
    %v1892 = vpop.f32.mrf.mxu0
    %v1893 = vadd.f32 %v1789, %v1892
    %v1894 = vpop.f32.mrf.mxu0
    %v1895 = vadd.f32 %v1791, %v1894
    %1896 = vmatmul.bf16.gmra.mxu0 %v862
    %v1897 = vpop.f32.mrf.mxu0
    %v1898 = vadd.f32 %v1794, %v1897
    %v1899 = vpop.f32.mrf.mxu0
    %v1900 = vadd.f32 %v1796, %v1899
    %1901 = vmatmul.bf16.gmra.mxu0 %v868
    %v1902 = vpop.f32.mrf.mxu0
    %v1903 = vadd.f32 %v1799, %v1902
    %v1904 = vpop.f32.mrf.mxu0
    %v1905 = vadd.f32 %v1801, %v1904
    %1906 = vmatmul.bf16.gmra.mxu0 %v874
    %v1907 = vpop.f32.mrf.mxu0
    %v1908 = vadd.f32 %v1804, %v1907
    %v1909 = vpop.f32.mrf.mxu0
    %v1910 = vadd.f32 %v1806, %v1909
    %1911 = vmatmul.bf16.gmra.mxu0 %v880
    %v1912 = vpop.f32.mrf.mxu0
    %v1913 = vadd.f32 %v1809, %v1912
    %v1914 = vpop.f32.mrf.mxu0
    %v1915 = vadd.f32 %v1811, %v1914
    %1916 = vmatmul.bf16.gmra.mxu0 %v886
    %v1917 = vpop.f32.mrf.mxu0
    %v1918 = vadd.f32 %v1814, %v1917
    %v1919 = vpop.f32.mrf.mxu0
    %v1920 = vadd.f32 %v1816, %v1919
    %1921 = vmatmul.bf16.gmra.mxu0 %v892
    %v1922 = vpop.f32.mrf.mxu0
    %v1923 = vadd.f32 %v1819, %v1922
    %v1924 = vpop.f32.mrf.mxu0
    %v1925 = vadd.f32 %v1821, %v1924
    %1926 = vmatmul.bf16.gmra.mxu0 %v898
    %v1927 = vpop.f32.mrf.mxu0
    %v1928 = vadd.f32 %v1824, %v1927
    %v1929 = vpop.f32.mrf.mxu0
    %v1930 = vadd.f32 %v1826, %v1929
    %1931 = vmatmul.bf16.gmra.mxu0 %v904
    %v1932 = vpop.f32.mrf.mxu0
    %v1933 = vadd.f32 %v1829, %v1932
    %v1934 = vpop.f32.mrf.mxu0
    %v1935 = vadd.f32 %v1831, %v1934
    %1936 = vmatmul.bf16.gmra.mxu0 %v910
    %v1937 = vpop.f32.mrf.mxu0
    %v1938 = vadd.f32 %v1834, %v1937
    %v1939 = vpop.f32.mrf.mxu0
    %v1940 = vadd.f32 %v1836, %v1939
    %1941 = vmatmul.bf16.gmra.mxu0 %v916
    %v1942 = vpop.f32.mrf.mxu0
    %v1943 = vadd.f32 %v1839, %v1942
    %v1944 = vpop.f32.mrf.mxu0
    %v1945 = vadd.f32 %v1841, %v1944
    %1946 = vmatmul.bf16.gmra.mxu0 %v922
    %v1947 = vpop.f32.mrf.mxu0
    %v1948 = vadd.f32 %v1844, %v1947
    %v1949 = vpop.f32.mrf.mxu0
    %v1950 = vadd.f32 %v1846, %v1949
    %1951 = vmatmul.bf16.gmra.mxu0 %v928
    %v1952 = vpop.f32.mrf.mxu0
    %v1953 = vadd.f32 %v1849, %v1952
    %v1954 = vpop.f32.mrf.mxu0
    %v1955 = vadd.f32 %v1851, %v1954
    %1956 = vmatmul.bf16.gmra.mxu0 %v934
    %v1957 = vpop.f32.mrf.mxu0
    %v1958 = vadd.f32 %v1854, %v1957
    %v1959 = vpop.f32.mrf.mxu0
    %v1960 = vadd.f32 %v1856, %v1959
    %1961 = vmatmul.bf16.gmra.mxu0 %v940
    %v1962 = vpop.f32.mrf.mxu0
    %v1963 = vadd.f32 %v1859, %v1962
    %v1964 = vpop.f32.mrf.mxu0
    %v1965 = vadd.f32 %v1861, %v1964
    %1966 = vdwg.mxu0
    %v1967 = vsub.f32 0.0, %v1873
    %v1968 = vsub.f32 0.0, %v1875
    %v1969 = vsub.f32 0.0, %v1878
    %v1970 = vsub.f32 0.0, %v1880
    %v1971 = vsub.f32 0.0, %v1883
    %v1972 = vsub.f32 0.0, %v1885
    %v1973 = vsub.f32 0.0, %v1888
    %v1974 = vsub.f32 0.0, %v1890
    %v1975 = vsub.f32 0.0, %v1893
    %v1976 = vsub.f32 0.0, %v1895
    %v1977 = vsub.f32 0.0, %v1898
    %v1978 = vsub.f32 0.0, %v1900
    %v1979 = vsub.f32 0.0, %v1903
    %v1980 = vsub.f32 0.0, %v1905
    %v1981 = vsub.f32 0.0, %v1908
    %v1982 = vsub.f32 0.0, %v1910
    %v1983 = vsub.f32 0.0, %v1913
    %v1984 = vsub.f32 0.0, %v1915
    %v1985 = vsub.f32 0.0, %v1918
    %v1986 = vsub.f32 0.0, %v1920
    %v1987 = vsub.f32 0.0, %v1923
    %v1988 = vsub.f32 0.0, %v1925
    %v1989 = vsub.f32 0.0, %v1928
    %v1990 = vsub.f32 0.0, %v1930
    %v1991 = vsub.f32 0.0, %v1933
    %v1992 = vsub.f32 0.0, %v1935
    %v1993 = vsub.f32 0.0, %v1938
    %v1994 = vsub.f32 0.0, %v1940
    %v1995 = vsub.f32 0.0, %v1943
    %v1996 = vsub.f32 0.0, %v1945
    %v1997 = vsub.f32 0.0, %v1948
    %v1998 = vsub.f32 0.0, %v1950
    %v1999 = vsub.f32 0.0, %v1953
    %v2000 = vsub.f32 0.0, %v1955
    %v2001 = vsub.f32 0.0, %v1958
    %v2002 = vsub.f32 0.0, %v1960
    %v2003 = vsub.f32 0.0, %v1963
    %v2004 = vsub.f32 0.0, %v1965
    %v2005 = vmul.f32 %v1967, 1.442695
    %v2006 = vpow.pop %v2005
    %v2007 = vmul.f32 %v1968, 1.442695
    %v2008 = vpow.pop %v2007
    %v2009 = vmul.f32 %v1969, 1.442695
    %v2010 = vpow.pop %v2009
    %v2011 = vmul.f32 %v1970, 1.442695
    %v2012 = vpow.pop %v2011
    %v2013 = vmul.f32 %v1971, 1.442695
    %v2014 = vpow.pop %v2013
    %v2015 = vmul.f32 %v1972, 1.442695
    %v2016 = vpow.pop %v2015
    %v2017 = vmul.f32 %v1973, 1.442695
    %v2018 = vpow.pop %v2017
    %v2019 = vmul.f32 %v1974, 1.442695
    %v2020 = vpow.pop %v2019
    %v2021 = vmul.f32 %v1975, 1.442695
    %v2022 = vpow.pop %v2021
    %v2023 = vmul.f32 %v1976, 1.442695
    %v2024 = vpow.pop %v2023
    %v2025 = vmul.f32 %v1977, 1.442695
    %v2026 = vpow.pop %v2025
    %v2027 = vmul.f32 %v1978, 1.442695
    %v2028 = vpow.pop %v2027
    %v2029 = vmul.f32 %v1979, 1.442695
    %v2030 = vpow.pop %v2029
    %v2031 = vmul.f32 %v1980, 1.442695
    %v2032 = vpow.pop %v2031
    %v2033 = vmul.f32 %v1981, 1.442695
    %v2034 = vpow.pop %v2033
    %v2035 = vmul.f32 %v1982, 1.442695
    %v2036 = vpow.pop %v2035
    %v2037 = vmul.f32 %v1983, 1.442695
    %v2038 = vpow.pop %v2037
    %v2039 = vmul.f32 %v1984, 1.442695
    %v2040 = vpow.pop %v2039
    %v2041 = vmul.f32 %v1985, 1.442695
    %v2042 = vpow.pop %v2041
    %v2043 = vmul.f32 %v1986, 1.442695
    %v2044 = vpow.pop %v2043
    %v2045 = vmul.f32 %v1987, 1.442695
    %v2046 = vpow.pop %v2045
    %v2047 = vmul.f32 %v1988, 1.442695
    %v2048 = vpow.pop %v2047
    %v2049 = vmul.f32 %v1989, 1.442695
    %v2050 = vpow.pop %v2049
    %v2051 = vmul.f32 %v1990, 1.442695
    %v2052 = vpow.pop %v2051
    %v2053 = vmul.f32 %v1991, 1.442695
    %v2054 = vpow.pop %v2053
    %v2055 = vmul.f32 %v1992, 1.442695
    %v2056 = vpow.pop %v2055
    %v2057 = vmul.f32 %v1993, 1.442695
    %v2058 = vpow.pop %v2057
    %v2059 = vmul.f32 %v1994, 1.442695
    %v2060 = vpow.pop %v2059
    %v2061 = vmul.f32 %v1995, 1.442695
    %v2062 = vpow.pop %v2061
    %v2063 = vmul.f32 %v1996, 1.442695
    %v2064 = vpow.pop %v2063
    %v2065 = vmul.f32 %v1997, 1.442695
    %v2066 = vpow.pop %v2065
    %v2067 = vmul.f32 %v1998, 1.442695
    %v2068 = vpow.pop %v2067
    %v2069 = vmul.f32 %v1999, 1.442695
    %v2070 = vpow.pop %v2069
    %v2071 = vmul.f32 %v2000, 1.442695
    %v2072 = vpow.pop %v2071
    %v2073 = vmul.f32 %v2001, 1.442695
    %v2074 = vpow.pop %v2073
    %v2075 = vmul.f32 %v2002, 1.442695
    %v2076 = vpow.pop %v2075
    %v2077 = vmul.f32 %v2003, 1.442695
    %v2078 = vpow.pop %v2077
    %v2079 = vmul.f32 %v2004, 1.442695
    %v2080 = vpow.pop %v2079
    %v2081 = vadd.f32 %v2006, 1.0
    %v2082 = vadd.f32 %v2008, 1.0
    %v2083 = vadd.f32 %v2010, 1.0
    %v2084 = vadd.f32 %v2012, 1.0
    %v2085 = vadd.f32 %v2014, 1.0
    %v2086 = vadd.f32 %v2016, 1.0
    %v2087 = vadd.f32 %v2018, 1.0
    %v2088 = vadd.f32 %v2020, 1.0
    %v2089 = vadd.f32 %v2022, 1.0
    %v2090 = vadd.f32 %v2024, 1.0
    %v2091 = vadd.f32 %v2026, 1.0
    %v2092 = vadd.f32 %v2028, 1.0
    %v2093 = vadd.f32 %v2030, 1.0
    %v2094 = vadd.f32 %v2032, 1.0
    %v2095 = vadd.f32 %v2034, 1.0
    %v2096 = vadd.f32 %v2036, 1.0
    %v2097 = vadd.f32 %v2038, 1.0
    %v2098 = vadd.f32 %v2040, 1.0
    %v2099 = vadd.f32 %v2042, 1.0
    %v2100 = vadd.f32 %v2044, 1.0
    %v2101 = vadd.f32 %v2046, 1.0
    %v2102 = vadd.f32 %v2048, 1.0
    %v2103 = vadd.f32 %v2050, 1.0
    %v2104 = vadd.f32 %v2052, 1.0
    %v2105 = vadd.f32 %v2054, 1.0
    %v2106 = vadd.f32 %v2056, 1.0
    %v2107 = vadd.f32 %v2058, 1.0
    %v2108 = vadd.f32 %v2060, 1.0
    %v2109 = vadd.f32 %v2062, 1.0
    %v2110 = vadd.f32 %v2064, 1.0
    %v2111 = vadd.f32 %v2066, 1.0
    %v2112 = vadd.f32 %v2068, 1.0
    %v2113 = vadd.f32 %v2070, 1.0
    %v2114 = vadd.f32 %v2072, 1.0
    %v2115 = vadd.f32 %v2074, 1.0
    %v2116 = vadd.f32 %v2076, 1.0
    %v2117 = vadd.f32 %v2078, 1.0
    %v2118 = vadd.f32 %v2080, 1.0
    %v2119 = vrcp.pop %v2081
    %v2120 = vrcp.pop %v2082
    %v2121 = vrcp.pop %v2083
    %v2122 = vrcp.pop %v2084
    %v2123 = vrcp.pop %v2085
    %v2124 = vrcp.pop %v2086
    %v2125 = vrcp.pop %v2087
    %v2126 = vrcp.pop %v2088
    %v2127 = vrcp.pop %v2089
    %v2128 = vrcp.pop %v2090
    %v2129 = vrcp.pop %v2091
    %v2130 = vrcp.pop %v2092
    %v2131 = vrcp.pop %v2093
    %v2132 = vrcp.pop %v2094
    %v2133 = vrcp.pop %v2095
    %v2134 = vrcp.pop %v2096
    %v2135 = vrcp.pop %v2097
    %v2136 = vrcp.pop %v2098
    %v2137 = vrcp.pop %v2099
    %v2138 = vrcp.pop %v2100
    %v2139 = vrcp.pop %v2101
    %v2140 = vrcp.pop %v2102
    %v2141 = vrcp.pop %v2103
    %v2142 = vrcp.pop %v2104
    %v2143 = vrcp.pop %v2105
    %v2144 = vrcp.pop %v2106
    %v2145 = vrcp.pop %v2107
    %v2146 = vrcp.pop %v2108
    %v2147 = vrcp.pop %v2109
    %v2148 = vrcp.pop %v2110
    %v2149 = vrcp.pop %v2111
    %v2150 = vrcp.pop %v2112
    %v2151 = vrcp.pop %v2113
    %v2152 = vrcp.pop %v2114
    %v2153 = vrcp.pop %v2115
    %v2154 = vrcp.pop %v2116
    %v2155 = vrcp.pop %v2117
    %v2156 = vrcp.pop %v2118
    %v2157 = vmul.f32 %v1873, %v2119
    %v2158 = vmul.f32 %v1875, %v2120
    %v2159 = vmul.f32 %v1878, %v2121
    %v2160 = vmul.f32 %v1880, %v2122
    %v2161 = vmul.f32 %v1883, %v2123
    %v2162 = vmul.f32 %v1885, %v2124
    %v2163 = vmul.f32 %v1888, %v2125
    %v2164 = vmul.f32 %v1890, %v2126
    %v2165 = vmul.f32 %v1893, %v2127
    %v2166 = vmul.f32 %v1895, %v2128
    %v2167 = vmul.f32 %v1898, %v2129
    %v2168 = vmul.f32 %v1900, %v2130
    %v2169 = vmul.f32 %v1903, %v2131
    %v2170 = vmul.f32 %v1905, %v2132
    %v2171 = vmul.f32 %v1908, %v2133
    %v2172 = vmul.f32 %v1910, %v2134
    %v2173 = vmul.f32 %v1913, %v2135
    %v2174 = vmul.f32 %v1915, %v2136
    %v2175 = vmul.f32 %v1918, %v2137
    %v2176 = vmul.f32 %v1920, %v2138
    %v2177 = vmul.f32 %v1923, %v2139
    %v2178 = vmul.f32 %v1925, %v2140
    %v2179 = vmul.f32 %v1928, %v2141
    %v2180 = vmul.f32 %v1930, %v2142
    %v2181 = vmul.f32 %v1933, %v2143
    %v2182 = vmul.f32 %v1935, %v2144
    %v2183 = vmul.f32 %v1938, %v2145
    %v2184 = vmul.f32 %v1940, %v2146
    %v2185 = vmul.f32 %v1943, %v2147
    %v2186 = vmul.f32 %v1945, %v2148
    %v2187 = vmul.f32 %v1948, %v2149
    %v2188 = vmul.f32 %v1950, %v2150
    %v2189 = vmul.f32 %v1953, %v2151
    %v2190 = vmul.f32 %v1955, %v2152
    %v2191 = vmul.f32 %v1958, %v2153
    %v2192 = vmul.f32 %v1960, %v2154
    %v2193 = vmul.f32 %v1963, %v2155
    %v2194 = vmul.f32 %v1965, %v2156
    %v2195 = vpack.c.bf16 %v2157, %v2157
    %v2196 = vpack.c.bf16 %v2158, %v2158
    %v2197 = vpack.c.bf16 %v2159, %v2159
    %v2198 = vpack.c.bf16 %v2160, %v2160
    %v2199 = vpack.c.bf16 %v2161, %v2161
    %v2200 = vpack.c.bf16 %v2162, %v2162
    %v2201 = vpack.c.bf16 %v2163, %v2163
    %v2202 = vpack.c.bf16 %v2164, %v2164
    %v2203 = vpack.c.bf16 %v2165, %v2165
    %v2204 = vpack.c.bf16 %v2166, %v2166
    %v2205 = vpack.c.bf16 %v2167, %v2167
    %v2206 = vpack.c.bf16 %v2168, %v2168
    %v2207 = vpack.c.bf16 %v2169, %v2169
    %v2208 = vpack.c.bf16 %v2170, %v2170
    %v2209 = vpack.c.bf16 %v2171, %v2171
    %v2210 = vpack.c.bf16 %v2172, %v2172
    %v2211 = vpack.c.bf16 %v2173, %v2173
    %v2212 = vpack.c.bf16 %v2174, %v2174
    %v2213 = vpack.c.bf16 %v2175, %v2175
    %v2214 = vpack.c.bf16 %v2176, %v2176
    %v2215 = vpack.c.bf16 %v2177, %v2177
    %v2216 = vpack.c.bf16 %v2178, %v2178
    %v2217 = vpack.c.bf16 %v2179, %v2179
    %v2218 = vpack.c.bf16 %v2180, %v2180
    %v2219 = vpack.c.bf16 %v2181, %v2181
    %v2220 = vpack.c.bf16 %v2182, %v2182
    %v2221 = vpack.c.bf16 %v2183, %v2183
    %v2222 = vpack.c.bf16 %v2184, %v2184
    %v2223 = vpack.c.bf16 %v2185, %v2185
    %v2224 = vpack.c.bf16 %v2186, %v2186
    %v2225 = vpack.c.bf16 %v2187, %v2187
    %v2226 = vpack.c.bf16 %v2188, %v2188
    %v2227 = vpack.c.bf16 %v2189, %v2189
    %v2228 = vpack.c.bf16 %v2190, %v2190
    %v2229 = vpack.c.bf16 %v2191, %v2191
    %v2230 = vpack.c.bf16 %v2192, %v2192
    %v2231 = vpack.c.bf16 %v2193, %v2193
    %v2232 = vpack.c.bf16 %v2194, %v2194
    %2233 = vst [vmem:[#allocation7] sm:$0xf] %v2195
    %2234 = vst [vmem:[#allocation7 + $0x4] sm:$0xf] %v2196
    %2235 = vst [vmem:[#allocation7 + $0x8] sm:$0xf] %v2197
    %2236 = vst [vmem:[#allocation7 + $0xc] sm:$0xf] %v2198
    %2237 = vst [vmem:[#allocation7 + $0x10] sm:$0xf] %v2199
    %2238 = vst [vmem:[#allocation7 + $0x14] sm:$0xf] %v2200
    %2239 = vst [vmem:[#allocation7 + $0x18] sm:$0xf] %v2201
    %2240 = vst [vmem:[#allocation7 + $0x1c] sm:$0xf] %v2202
    %2241 = vst [vmem:[#allocation7 + $0x20] sm:$0xf] %v2203
    %2242 = vst [vmem:[#allocation7 + $0x24] sm:$0xf] %v2204
    %2243 = vst [vmem:[#allocation7 + $0x28] sm:$0xf] %v2205
    %2244 = vst [vmem:[#allocation7 + $0x2c] sm:$0xf] %v2206
    %2245 = vst [vmem:[#allocation7 + $0x30] sm:$0xf] %v2207
    %2246 = vst [vmem:[#allocation7 + $0x34] sm:$0xf] %v2208
    %2247 = vst [vmem:[#allocation7 + $0x38] sm:$0xf] %v2209
    %2248 = vst [vmem:[#allocation7 + $0x3c] sm:$0xf] %v2210
    %2249 = vst [vmem:[#allocation7 + $0x40] sm:$0xf] %v2211
    %2250 = vst [vmem:[#allocation7 + $0x44] sm:$0xf] %v2212
    %2251 = vst [vmem:[#allocation7 + $0x48] sm:$0xf] %v2213
    %2252 = vst [vmem:[#allocation7 + $0x4c] sm:$0xf] %v2214
    %2253 = vst [vmem:[#allocation7 + $0x50] sm:$0xf] %v2215
    %2254 = vst [vmem:[#allocation7 + $0x54] sm:$0xf] %v2216
    %2255 = vst [vmem:[#allocation7 + $0x58] sm:$0xf] %v2217
    %2256 = vst [vmem:[#allocation7 + $0x5c] sm:$0xf] %v2218
    %2257 = vst [vmem:[#allocation7 + $0x60] sm:$0xf] %v2219
    %2258 = vst [vmem:[#allocation7 + $0x64] sm:$0xf] %v2220
    %2259 = vst [vmem:[#allocation7 + $0x68] sm:$0xf] %v2221
    %2260 = vst [vmem:[#allocation7 + $0x6c] sm:$0xf] %v2222
    %2261 = vst [vmem:[#allocation7 + $0x70] sm:$0xf] %v2223
    %2262 = vst [vmem:[#allocation7 + $0x74] sm:$0xf] %v2224
    %2263 = vst [vmem:[#allocation7 + $0x78] sm:$0xf] %v2225
    %2264 = vst [vmem:[#allocation7 + $0x7c] sm:$0xf] %v2226
    %2265 = vst [vmem:[#allocation7 + $0x80] sm:$0xf] %v2227
    %2266 = vst [vmem:[#allocation7 + $0x84] sm:$0xf] %v2228
    %2267 = vst [vmem:[#allocation7 + $0x88] sm:$0xf] %v2229
    %2268 = vst [vmem:[#allocation7 + $0x8c] sm:$0xf] %v2230
    %2269 = vst [vmem:[#allocation7 + $0x90] sm:$0xf] %v2231
    %2270 = vst [vmem:[#allocation7 + $0x94] sm:$0xf] %v2232
    // Predicated region
    $region22: #{tpu_custom_call.1} parent=1 // pred_check
      _
    $region23: #{tpu_custom_call.1} parent=1 // pred_check_branch
      %2272 = sbr.rel (0) target = $region25
    $region24: #{tpu_custom_call.1} parent=1 // pred_region
      %2274 = vsyncadd [#allocation4], 0
      %s2275 = sshll.u32 [#allocation7], 4
      %s2276 = int_to_ptr.vmem [resolvable:$true] %s2275
      %s2277 = sshll.u32 %s3, 4
      %s2278 = int_to_ptr.hbm [resolvable:$true] %s2277
      %2283 = dma.vmem_to_hbm [thread:$0]  %s2276, 2432, %s2278, [#allocation4], 64, 64, 4
    $region25: #{tpu_custom_call.1} parent=1 // pred_fallthru
      _
    // Predicated region
    $region26: #{tpu_custom_call.1} parent=1 // pred_check
      _
    $region27: #{tpu_custom_call.1} parent=1 // pred_check_branch
      %2285 = sbr.rel (0) target = $region29
    $region28: #{tpu_custom_call.1} parent=1 // pred_region
      %2287 = dma.done [#allocation4], 2432
    $region29: #{tpu_custom_call.1} parent=1 // pred_fallthru
      _
    %2288 = vsyncpa [#allocation3], 1
    %2289 = vsyncpa [#allocation6], 1
    %2290 = vsyncpa [#allocation4], 1

</llo_original>
